<compile_context>
chip_gen: v5e
topology: v5e:2x2
jax: 0.10.0
libtpu: 0.0.40
codegen_flags: <defaults>
</compile_context>

<pallas_src>
import jax
import jax.numpy as jnp
import numpy as np
from jax import lax
from jax.experimental import pallas as pl
from jax.experimental.pallas import tpu as pltpu

DIM_INPUT = 40   # dim_input of the module
H1 = 32          # fc1 output
HG = 16          # GRU hidden size
NCLS = 2         # fc2 output


def _variable_rnn_kernel(max_len_ref,                  # SMEM (1,) i32  (scalar prefetch)
                         seqs_ref,                     # (T, tb, D)  bf16, time-major
                         len_ref,                      # (1, tb)     i32
                         w1_ref, b1_ref,               # (D, 32) bf16, (1, 32) f32
                         wihT_ref, bgi_ref,            # (48, 32) f32, (48, 1) f32
                         whhT_ref, bnh_ref,            # (48, 16) f32, (16, 1) f32
                         w2T_ref, b2T_ref,             # (2, 16)  f32, (2, 1)  f32
                         out_ref):                     # (2, tb)  f32
    T, tb, D = seqs_ref.shape

    lengths = len_ref[...]                             # (1, tb) int32, lane-dense
    max_len = max_len_ref[0]                           # global max(lengths)

    # ---- hoisted input-side work (no dependence on h) ---------------------
    # t-major flatten: merging leading dims is layout-free when tb is a
    # multiple of the sublane pack (true for production tile sizes).
    x = seqs_ref[...].reshape(T * tb, D)               # bf16
    a = jnp.tanh(jnp.dot(x, w1_ref[...], preferred_element_type=jnp.float32)
                 + b1_ref[...])                        # (T*tb, 32) f32; dropout = identity (eval)
    # One fused 48-wide input-gate projection, emitted batch-on-lanes:
    # gi_T[g, t*tb + b] = sum_h wih[g, h] * a[t*tb + b, h]   (rhs contracted on
    # its last dim -> no separate transpose op on the big activation tensor).
    gi_T = lax.dot_general(wihT_ref[...], a,
                           dimension_numbers=(((1,), (1,)), ((), ())),
                           preferred_element_type=jnp.float32) + bgi_ref[...]   # (48, T*tb)

    whhT = whhT_ref[...]                               # (48, 16), resident across steps
    b_nh = jnp.broadcast_to(bnh_ref[...], (HG, tb))    # hoisted broadcast (no per-iter bcast)

    # ---- serial GRU recurrence, batch-on-lanes (HG, tb), all f32 ----------
    # Fully unrolled (T is small & static); for larger T switch to
    # lax.fori_loop(..., unroll=2..4) to cap live vregs.
    h = jnp.zeros((HG, tb), jnp.float32)
    for t in range(T):
        gi = gi_T[:, t * tb:(t + 1) * tb]              # (48, tb) static lane slice
        gh = jnp.dot(whhT, h, preferred_element_type=jnp.float32)   # (48, tb): one fused dot/step
        r = jax.nn.sigmoid(gi[0:HG] + gh[0:HG])                      # b_ir+b_hr folded into gi
        z = jax.nn.sigmoid(gi[HG:2 * HG] + gh[HG:2 * HG])            # b_iz+b_hz folded into gi
        n = jnp.tanh(gi[2 * HG:] + r * (gh[2 * HG:] + b_nh))         # b_hn must stay inside r*(...)
        h_new = (1.0 - z) * n + z * h
        # pack_padded_sequence: hidden state stops updating at t >= lengths[b]
        h = jnp.where(t < lengths, h_new, h)
    # TODO(synk): prefetch a per-tile max length (length-bucketed batch) and bound
    # the recurrence to it instead of always running all T steps.

    # pad_packed_sequence zero-pads to the GLOBAL max(lengths); [:, -1, :] is the
    # GRU output only for full-length rows, the zero vector otherwise.
    h_sel = jnp.where(lengths == max_len, h, 0.0)
    out_ref[...] = (jnp.dot(w2T_ref[...], h_sel, preferred_element_type=jnp.float32)
                    + b2T_ref[...])                    # (2, tb) lane-dense store


def my_variable_rnn_forward(seqs, lengths, params, *, batch_tile=512):
    """seqs: (B, T, D) float32 batch-first, lengths: (B,) int — returns (B, 2) float32."""
    w1, b1, wih, bih, whh, bhh, w2, b2 = params
    B, T, D = seqs.shape

    lengths_i32 = lengths.astype(jnp.int32)
    max_len = jnp.max(lengths_i32).reshape(1)          # (1,) -> SMEM scalar prefetch

    tb = int(min(B, batch_tile))
    nb = (B + tb - 1) // tb
    Bp = nb * tb

    # Time-major + bf16: halves bytes of the only large HBM stream and puts the
    # batch dimension on lanes for the recurrence.
    seqs_t = jnp.transpose(seqs.astype(jnp.bfloat16), (1, 0, 2))     # (T, B, D)
    if Bp != B:
        seqs_t = jnp.pad(seqs_t, ((0, 0), (0, Bp - B), (0, 0)))
        lengths_i32 = jnp.pad(lengths_i32, (0, Bp - B))               # pad rows: length 0 (dropped)
    lengths_2d = lengths_i32.reshape(1, Bp)

    # Fused / transposed parameters (PyTorch gate order [r|z|n]); fold the
    # r/z biases at trace time, keep b_hn separate (it sits inside r*(...)).
    wih_T = wih.T.astype(jnp.float32)                                 # (48, 32)
    whh_T = whh.T.astype(jnp.float32)                                 # (48, 16)
    b_gi = (bih + jnp.concatenate(
        [bhh[:, :2 * HG], jnp.zeros_like(bhh[:, 2 * HG:])], axis=1)).T   # (48, 1)
    b_nh = bhh[:, 2 * HG:].T                                          # (16, 1)
    w2_T = w2.T                                                       # (2, 16)
    b2_T = b2.T                                                       # (2, 1)
    w1_bf = w1.astype(jnp.bfloat16)

    resident = lambda i, ml: (0, 0)                    # weights/biases stay VMEM-resident
    grid_spec = pltpu.PrefetchScalarGridSpec(
        num_scalar_prefetch=1,
        grid=(nb,),
        in_specs=[
            pl.BlockSpec((T, tb, D), lambda i, ml: (0, i, 0)),        # seqs (time-major, bf16)
            pl.BlockSpec((1, tb), lambda i, ml: (0, i)),              # lengths (lane-dense)
            pl.BlockSpec((D, H1), resident),                          # w1 (bf16)
            pl.BlockSpec((1, H1), resident),                          # b1
            pl.BlockSpec((3 * HG, H1), resident),                     # wih^T fused (48,32)
            pl.BlockSpec((3 * HG, 1), resident),                      # folded input-gate bias
            pl.BlockSpec((3 * HG, HG), resident),                     # whh^T fused (48,16)
            pl.BlockSpec((HG, 1), resident),                          # b_hn
            pl.BlockSpec((NCLS, HG), resident),                       # w2^T
            pl.BlockSpec((NCLS, 1), resident),                        # b2^T
        ],
        out_specs=pl.BlockSpec((NCLS, tb), lambda i, ml: (0, i)),     # (2, tb) lane-dense
    )

    out_t = pl.pallas_call(
        _variable_rnn_kernel,
        out_shape=jax.ShapeDtypeStruct((NCLS, Bp), jnp.float32),
        grid_spec=grid_spec,
        compiler_params=pltpu.CompilerParams(
            dimension_semantics=("parallel",),         # batch tiles independent (megacore sharding)
            vmem_limit_bytes=48 * 1024 * 1024,         # guardrail: under v7x's 64 MiB physical VMEM
        ),
    )(max_len, seqs_t, lengths_2d,
      w1_bf, b1, wih_T, b_gi, whh_T, b_nh, w2_T, b2_T)

    return out_t[:, :B].T                              # (B, 2)


def init_params(key):
    """Deterministic synthetic parameters, PyTorch-style uniform(-1/sqrt(fan_in))."""
    ks = jax.random.split(key, 8)

    def u(k, shape, fan_in):
        bound = 1.0 / np.sqrt(fan_in)
        return jax.random.uniform(k, shape, jnp.float32, -bound, bound)

    w1 = u(ks[0], (DIM_INPUT, H1), DIM_INPUT)          # fc1.weight.T
    b1 = u(ks[1], (1, H1), DIM_INPUT)                  # fc1.bias
    wih = u(ks[2], (H1, 3 * HG), HG)                   # gru.weight_ih_l0.T  [r|z|n]
    bih = u(ks[3], (1, 3 * HG), HG)                    # gru.bias_ih_l0
    whh = u(ks[4], (HG, 3 * HG), HG)                   # gru.weight_hh_l0.T  [r|z|n]
    bhh = u(ks[5], (1, 3 * HG), HG)                    # gru.bias_hh_l0
    w2 = u(ks[6], (HG, NCLS), HG)                      # fc2.weight.T
    b2 = u(ks[7], (1, NCLS), HG)                       # fc2.bias
    return (w1, b1, wih, bih, whh, bhh, w2, b2)


def reference_forward(seqs, lengths, params):
    """Pure-JAX replica of the PyTorch forward (eval mode) for validation.
    fc1 uses the same bf16 operand cast as the kernel so tolerances stay tight;
    the recurrence and output head are full f32, as in the kernel."""
    w1, b1, wih, bih, whh, bhh, w2, b2 = params
    B, T, _ = seqs.shape
    x = jnp.tanh(jnp.dot(seqs.astype(jnp.bfloat16), w1.astype(jnp.bfloat16),
                         preferred_element_type=jnp.float32) + b1)    # (B, T, 32)
    h = jnp.zeros((B, HG), jnp.float32)
    for t in range(T):
        gi = x[:, t, :] @ wih + bih
        gh = h @ whh + bhh
        r = jax.nn.sigmoid(gi[:, :HG] + gh[:, :HG])
        z = jax.nn.sigmoid(gi[:, HG:2 * HG] + gh[:, HG:2 * HG])
        n = jnp.tanh(gi[:, 2 * HG:] + r * gh[:, 2 * HG:])
        h_new = (1.0 - z) * n + z * h
        h = jnp.where((t < lengths)[:, None], h_new, h)
    max_len = jnp.max(lengths)
    h_sel = jnp.where((lengths == max_len)[:, None], h, 0.0)
    return h_sel @ w2 + b2


if __name__ == "__main__":
    key = jax.random.PRNGKey(0)
    k_params, k_seqs = jax.random.split(key)

    B, T = 4, 8
    params = init_params(k_params)
    seqs = jax.random.normal(k_seqs, (B, T, DIM_INPUT), jnp.float32)
    lengths = jnp.array([8, 5, 8, 3], jnp.int32)       # variable lengths, max == 8

    out = my_variable_rnn_forward(seqs, lengths, params)
    out = jax.block_until_ready(out)

    ref = reference_forward(seqs, lengths, params)
    np.testing.assert_allclose(np.asarray(out), np.asarray(ref), rtol=1e-3, atol=1e-3)

    print("KERNEL_OK")
</pallas_src>

<mosaic_0001>
module attributes {stable_mosaic.version = 11 : i64} {
  func.func @_variable_rnn_kernel(%arg0: i32, %arg1: memref<1xi32, #tpu.memory_space<smem>>, %arg2: memref<8x4x40xbf16, #tpu.memory_space<vmem>>, %arg3: memref<1x4xi32, #tpu.memory_space<vmem>>, %arg4: memref<40x32xbf16, #tpu.memory_space<vmem>>, %arg5: memref<1x32xf32, #tpu.memory_space<vmem>>, %arg6: memref<48x32xf32, #tpu.memory_space<vmem>>, %arg7: memref<48x1xf32, #tpu.memory_space<vmem>>, %arg8: memref<48x16xf32, #tpu.memory_space<vmem>>, %arg9: memref<16x1xf32, #tpu.memory_space<vmem>>, %arg10: memref<2x16xf32, #tpu.memory_space<vmem>>, %arg11: memref<2x1xf32, #tpu.memory_space<vmem>>, %arg12: memref<2x4xf32, #tpu.memory_space<vmem>>) attributes {dimension_semantics = [#tpu.dimension_semantics<parallel>], iteration_bounds = array<i64: 1>, scalar_prefetch = 1 : i64, scratch_operands = 0 : i64, tpu.core_type = #tpu.core_type<tc>, window_params = [{transform_indices = @transform_0, window_bounds = array<i64: 8, 4, 40>}, {transform_indices = @transform_1, window_bounds = array<i64: 1, 4>}, {pipeline_mode = #tpu.pipeline_mode<synchronous>, transform_indices = @transform_2, window_bounds = array<i64: 40, 32>}, {pipeline_mode = #tpu.pipeline_mode<synchronous>, transform_indices = @transform_3, window_bounds = array<i64: 1, 32>}, {pipeline_mode = #tpu.pipeline_mode<synchronous>, transform_indices = @transform_4, window_bounds = array<i64: 48, 32>}, {pipeline_mode = #tpu.pipeline_mode<synchronous>, transform_indices = @transform_5, window_bounds = array<i64: 48, 1>}, {pipeline_mode = #tpu.pipeline_mode<synchronous>, transform_indices = @transform_6, window_bounds = array<i64: 48, 16>}, {pipeline_mode = #tpu.pipeline_mode<synchronous>, transform_indices = @transform_7, window_bounds = array<i64: 16, 1>}, {pipeline_mode = #tpu.pipeline_mode<synchronous>, transform_indices = @transform_8, window_bounds = array<i64: 2, 16>}, {pipeline_mode = #tpu.pipeline_mode<synchronous>, transform_indices = @transform_9, window_bounds = array<i64: 2, 1>}, {transform_indices = @transform_10, window_bounds = array<i64: 2, 4>}]} {
    %c0 = arith.constant 0 : index
    %c0_0 = arith.constant 0 : index
    %0 = vector.load %arg3[%c0, %c0_0] : memref<1x4xi32, #tpu.memory_space<vmem>>, vector<1x4xi32>
    %c0_1 = arith.constant 0 : index
    %1 = memref.load %arg1[%c0_1] : memref<1xi32, #tpu.memory_space<smem>>
    %c0_2 = arith.constant 0 : index
    %c0_3 = arith.constant 0 : index
    %c0_4 = arith.constant 0 : index
    %2 = vector.load %arg2[%c0_2, %c0_3, %c0_4] : memref<8x4x40xbf16, #tpu.memory_space<vmem>>, vector<8x4x40xbf16>
    %3 = vector.shape_cast %2 : vector<8x4x40xbf16> to vector<32x40xbf16>
    %c0_5 = arith.constant 0 : index
    %c0_6 = arith.constant 0 : index
    %4 = vector.load %arg4[%c0_5, %c0_6] : memref<40x32xbf16, #tpu.memory_space<vmem>>, vector<40x32xbf16>
    %cst = arith.constant dense<0.000000e+00> : vector<32x32xf32>
    %5 = tpu.matmul %3, %4, %cst {dimension_numbers = #tpu.dot_dimension_numbers<[1], [0], [0], [1], [0, 0, 1, 1], [], []>} : vector<32x40xbf16>, vector<40x32xbf16>, vector<32x32xf32> -> vector<32x32xf32>
    %c0_7 = arith.constant 0 : index
    %c0_8 = arith.constant 0 : index
    %6 = vector.load %arg5[%c0_7, %c0_8] : memref<1x32xf32, #tpu.memory_space<vmem>>, vector<1x32xf32>
    %7 = vector.broadcast %6 : vector<1x32xf32> to vector<32x32xf32>
    %8 = arith.addf %5, %7 : vector<32x32xf32>
    %9 = math.tanh %8 : vector<32x32xf32>
    %c0_9 = arith.constant 0 : index
    %c0_10 = arith.constant 0 : index
    %10 = vector.load %arg6[%c0_9, %c0_10] : memref<48x32xf32, #tpu.memory_space<vmem>>, vector<48x32xf32>
    %cst_11 = arith.constant dense<0.000000e+00> : vector<48x32xf32>
    %11 = tpu.matmul %10, %9, %cst_11 {dimension_numbers = #tpu.dot_dimension_numbers<[1], [1], [0], [0], [0, 0, 1, 0], [], []>} : vector<48x32xf32>, vector<32x32xf32>, vector<48x32xf32> -> vector<48x32xf32>
    %c0_12 = arith.constant 0 : index
    %c0_13 = arith.constant 0 : index
    %12 = vector.load %arg7[%c0_12, %c0_13] : memref<48x1xf32, #tpu.memory_space<vmem>>, vector<48x1xf32>
    %13 = vector.broadcast %12 : vector<48x1xf32> to vector<48x32xf32>
    %14 = arith.addf %11, %13 : vector<48x32xf32>
    %c0_14 = arith.constant 0 : index
    %c0_15 = arith.constant 0 : index
    %15 = vector.load %arg8[%c0_14, %c0_15] : memref<48x16xf32, #tpu.memory_space<vmem>>, vector<48x16xf32>
    %c0_16 = arith.constant 0 : index
    %c0_17 = arith.constant 0 : index
    %16 = vector.load %arg9[%c0_16, %c0_17] : memref<16x1xf32, #tpu.memory_space<vmem>>, vector<16x1xf32>
    %17 = vector.shape_cast %16 : vector<16x1xf32> to vector<16x1xf32>
    %18 = vector.broadcast %17 : vector<16x1xf32> to vector<16x4xf32>
    %cst_18 = arith.constant 0.000000e+00 : f32
    %19 = vector.broadcast %cst_18 : f32 to vector<16x4xf32>
    %20 = vector.extract_strided_slice %14 {offsets = [0, 0], sizes = [48, 4], strides = [1, 1]} : vector<48x32xf32> to vector<48x4xf32>
    %cst_19 = arith.constant dense<0.000000e+00> : vector<48x4xf32>
    %21 = tpu.matmul %15, %19, %cst_19 {dimension_numbers = #tpu.dot_dimension_numbers<[1], [0], [0], [1], [0, 0, 1, 1], [], []>} : vector<48x16xf32>, vector<16x4xf32>, vector<48x4xf32> -> vector<48x4xf32>
    %22 = vector.extract_strided_slice %20 {offsets = [0, 0], sizes = [16, 4], strides = [1, 1]} : vector<48x4xf32> to vector<16x4xf32>
    %23 = vector.extract_strided_slice %21 {offsets = [0, 0], sizes = [16, 4], strides = [1, 1]} : vector<48x4xf32> to vector<16x4xf32>
    %24 = arith.addf %22, %23 : vector<16x4xf32>
    %25 = arith.negf %24 : vector<16x4xf32>
    %26 = math.exp %25 : vector<16x4xf32>
    %cst_20 = arith.constant 1.000000e+00 : f32
    %27 = vector.broadcast %cst_20 : f32 to vector<16x4xf32>
    %28 = arith.addf %27, %26 : vector<16x4xf32>
    %29 = arith.divf %27, %28 : vector<16x4xf32>
    %30 = vector.extract_strided_slice %20 {offsets = [16, 0], sizes = [16, 4], strides = [1, 1]} : vector<48x4xf32> to vector<16x4xf32>
    %31 = vector.extract_strided_slice %21 {offsets = [16, 0], sizes = [16, 4], strides = [1, 1]} : vector<48x4xf32> to vector<16x4xf32>
    %32 = arith.addf %30, %31 : vector<16x4xf32>
    %33 = arith.negf %32 : vector<16x4xf32>
    %34 = math.exp %33 : vector<16x4xf32>
    %cst_21 = arith.constant 1.000000e+00 : f32
    %35 = vector.broadcast %cst_21 : f32 to vector<16x4xf32>
    %36 = arith.addf %35, %34 : vector<16x4xf32>
    %37 = arith.divf %35, %36 : vector<16x4xf32>
    %38 = vector.extract_strided_slice %20 {offsets = [32, 0], sizes = [16, 4], strides = [1, 1]} : vector<48x4xf32> to vector<16x4xf32>
    %39 = vector.extract_strided_slice %21 {offsets = [32, 0], sizes = [16, 4], strides = [1, 1]} : vector<48x4xf32> to vector<16x4xf32>
    %40 = arith.addf %39, %18 : vector<16x4xf32>
    %41 = arith.mulf %29, %40 : vector<16x4xf32>
    %42 = arith.addf %38, %41 : vector<16x4xf32>
    %43 = math.tanh %42 : vector<16x4xf32>
    %cst_22 = arith.constant 1.000000e+00 : f32
    %44 = vector.broadcast %cst_22 : f32 to vector<16x4xf32>
    %45 = arith.subf %44, %37 : vector<16x4xf32>
    %46 = arith.mulf %45, %43 : vector<16x4xf32>
    %47 = arith.mulf %37, %19 : vector<16x4xf32>
    %48 = arith.addf %46, %47 : vector<16x4xf32>
    %c0_i32 = arith.constant 0 : i32
    %49 = vector.broadcast %c0_i32 : i32 to vector<1x4xi32>
    %50 = arith.cmpi sgt, %0, %49 : vector<1x4xi32>
    %51 = vector.shape_cast %50 : vector<1x4xi1> to vector<1x4xi1>
    %52 = vector.broadcast %51 : vector<1x4xi1> to vector<16x4xi1>
    %53 = arith.select %52, %48, %19 : vector<16x4xi1>, vector<16x4xf32>
    %54 = vector.extract_strided_slice %14 {offsets = [0, 4], sizes = [48, 4], strides = [1, 1]} : vector<48x32xf32> to vector<48x4xf32>
    %cst_23 = arith.constant dense<0.000000e+00> : vector<48x4xf32>
    %55 = tpu.matmul %15, %53, %cst_23 {dimension_numbers = #tpu.dot_dimension_numbers<[1], [0], [0], [1], [0, 0, 1, 1], [], []>} : vector<48x16xf32>, vector<16x4xf32>, vector<48x4xf32> -> vector<48x4xf32>
    %56 = vector.extract_strided_slice %54 {offsets = [0, 0], sizes = [16, 4], strides = [1, 1]} : vector<48x4xf32> to vector<16x4xf32>
    %57 = vector.extract_strided_slice %55 {offsets = [0, 0], sizes = [16, 4], strides = [1, 1]} : vector<48x4xf32> to vector<16x4xf32>
    %58 = arith.addf %56, %57 : vector<16x4xf32>
    %59 = arith.negf %58 : vector<16x4xf32>
    %60 = math.exp %59 : vector<16x4xf32>
    %cst_24 = arith.constant 1.000000e+00 : f32
    %61 = vector.broadcast %cst_24 : f32 to vector<16x4xf32>
    %62 = arith.addf %61, %60 : vector<16x4xf32>
    %63 = arith.divf %61, %62 : vector<16x4xf32>
    %64 = vector.extract_strided_slice %54 {offsets = [16, 0], sizes = [16, 4], strides = [1, 1]} : vector<48x4xf32> to vector<16x4xf32>
    %65 = vector.extract_strided_slice %55 {offsets = [16, 0], sizes = [16, 4], strides = [1, 1]} : vector<48x4xf32> to vector<16x4xf32>
    %66 = arith.addf %64, %65 : vector<16x4xf32>
    %67 = arith.negf %66 : vector<16x4xf32>
    %68 = math.exp %67 : vector<16x4xf32>
    %cst_25 = arith.constant 1.000000e+00 : f32
    %69 = vector.broadcast %cst_25 : f32 to vector<16x4xf32>
    %70 = arith.addf %69, %68 : vector<16x4xf32>
    %71 = arith.divf %69, %70 : vector<16x4xf32>
    %72 = vector.extract_strided_slice %54 {offsets = [32, 0], sizes = [16, 4], strides = [1, 1]} : vector<48x4xf32> to vector<16x4xf32>
    %73 = vector.extract_strided_slice %55 {offsets = [32, 0], sizes = [16, 4], strides = [1, 1]} : vector<48x4xf32> to vector<16x4xf32>
    %74 = arith.addf %73, %18 : vector<16x4xf32>
    %75 = arith.mulf %63, %74 : vector<16x4xf32>
    %76 = arith.addf %72, %75 : vector<16x4xf32>
    %77 = math.tanh %76 : vector<16x4xf32>
    %cst_26 = arith.constant 1.000000e+00 : f32
    %78 = vector.broadcast %cst_26 : f32 to vector<16x4xf32>
    %79 = arith.subf %78, %71 : vector<16x4xf32>
    %80 = arith.mulf %79, %77 : vector<16x4xf32>
    %81 = arith.mulf %71, %53 : vector<16x4xf32>
    %82 = arith.addf %80, %81 : vector<16x4xf32>
    %c1_i32 = arith.constant 1 : i32
    %83 = vector.broadcast %c1_i32 : i32 to vector<1x4xi32>
    %84 = arith.cmpi sgt, %0, %83 : vector<1x4xi32>
    %85 = vector.shape_cast %84 : vector<1x4xi1> to vector<1x4xi1>
    %86 = vector.broadcast %85 : vector<1x4xi1> to vector<16x4xi1>
    %87 = arith.select %86, %82, %53 : vector<16x4xi1>, vector<16x4xf32>
    %88 = vector.extract_strided_slice %14 {offsets = [0, 8], sizes = [48, 4], strides = [1, 1]} : vector<48x32xf32> to vector<48x4xf32>
    %cst_27 = arith.constant dense<0.000000e+00> : vector<48x4xf32>
    %89 = tpu.matmul %15, %87, %cst_27 {dimension_numbers = #tpu.dot_dimension_numbers<[1], [0], [0], [1], [0, 0, 1, 1], [], []>} : vector<48x16xf32>, vector<16x4xf32>, vector<48x4xf32> -> vector<48x4xf32>
    %90 = vector.extract_strided_slice %88 {offsets = [0, 0], sizes = [16, 4], strides = [1, 1]} : vector<48x4xf32> to vector<16x4xf32>
    %91 = vector.extract_strided_slice %89 {offsets = [0, 0], sizes = [16, 4], strides = [1, 1]} : vector<48x4xf32> to vector<16x4xf32>
    %92 = arith.addf %90, %91 : vector<16x4xf32>
    %93 = arith.negf %92 : vector<16x4xf32>
    %94 = math.exp %93 : vector<16x4xf32>
    %cst_28 = arith.constant 1.000000e+00 : f32
    %95 = vector.broadcast %cst_28 : f32 to vector<16x4xf32>
    %96 = arith.addf %95, %94 : vector<16x4xf32>
    %97 = arith.divf %95, %96 : vector<16x4xf32>
    %98 = vector.extract_strided_slice %88 {offsets = [16, 0], sizes = [16, 4], strides = [1, 1]} : vector<48x4xf32> to vector<16x4xf32>
    %99 = vector.extract_strided_slice %89 {offsets = [16, 0], sizes = [16, 4], strides = [1, 1]} : vector<48x4xf32> to vector<16x4xf32>
    %100 = arith.addf %98, %99 : vector<16x4xf32>
    %101 = arith.negf %100 : vector<16x4xf32>
    %102 = math.exp %101 : vector<16x4xf32>
    %cst_29 = arith.constant 1.000000e+00 : f32
    %103 = vector.broadcast %cst_29 : f32 to vector<16x4xf32>
    %104 = arith.addf %103, %102 : vector<16x4xf32>
    %105 = arith.divf %103, %104 : vector<16x4xf32>
    %106 = vector.extract_strided_slice %88 {offsets = [32, 0], sizes = [16, 4], strides = [1, 1]} : vector<48x4xf32> to vector<16x4xf32>
    %107 = vector.extract_strided_slice %89 {offsets = [32, 0], sizes = [16, 4], strides = [1, 1]} : vector<48x4xf32> to vector<16x4xf32>
    %108 = arith.addf %107, %18 : vector<16x4xf32>
    %109 = arith.mulf %97, %108 : vector<16x4xf32>
    %110 = arith.addf %106, %109 : vector<16x4xf32>
    %111 = math.tanh %110 : vector<16x4xf32>
    %cst_30 = arith.constant 1.000000e+00 : f32
    %112 = vector.broadcast %cst_30 : f32 to vector<16x4xf32>
    %113 = arith.subf %112, %105 : vector<16x4xf32>
    %114 = arith.mulf %113, %111 : vector<16x4xf32>
    %115 = arith.mulf %105, %87 : vector<16x4xf32>
    %116 = arith.addf %114, %115 : vector<16x4xf32>
    %c2_i32 = arith.constant 2 : i32
    %117 = vector.broadcast %c2_i32 : i32 to vector<1x4xi32>
    %118 = arith.cmpi sgt, %0, %117 : vector<1x4xi32>
    %119 = vector.shape_cast %118 : vector<1x4xi1> to vector<1x4xi1>
    %120 = vector.broadcast %119 : vector<1x4xi1> to vector<16x4xi1>
    %121 = arith.select %120, %116, %87 : vector<16x4xi1>, vector<16x4xf32>
    %122 = vector.extract_strided_slice %14 {offsets = [0, 12], sizes = [48, 4], strides = [1, 1]} : vector<48x32xf32> to vector<48x4xf32>
    %cst_31 = arith.constant dense<0.000000e+00> : vector<48x4xf32>
    %123 = tpu.matmul %15, %121, %cst_31 {dimension_numbers = #tpu.dot_dimension_numbers<[1], [0], [0], [1], [0, 0, 1, 1], [], []>} : vector<48x16xf32>, vector<16x4xf32>, vector<48x4xf32> -> vector<48x4xf32>
    %124 = vector.extract_strided_slice %122 {offsets = [0, 0], sizes = [16, 4], strides = [1, 1]} : vector<48x4xf32> to vector<16x4xf32>
    %125 = vector.extract_strided_slice %123 {offsets = [0, 0], sizes = [16, 4], strides = [1, 1]} : vector<48x4xf32> to vector<16x4xf32>
    %126 = arith.addf %124, %125 : vector<16x4xf32>
    %127 = arith.negf %126 : vector<16x4xf32>
    %128 = math.exp %127 : vector<16x4xf32>
    %cst_32 = arith.constant 1.000000e+00 : f32
    %129 = vector.broadcast %cst_32 : f32 to vector<16x4xf32>
    %130 = arith.addf %129, %128 : vector<16x4xf32>
    %131 = arith.divf %129, %130 : vector<16x4xf32>
    %132 = vector.extract_strided_slice %122 {offsets = [16, 0], sizes = [16, 4], strides = [1, 1]} : vector<48x4xf32> to vector<16x4xf32>
    %133 = vector.extract_strided_slice %123 {offsets = [16, 0], sizes = [16, 4], strides = [1, 1]} : vector<48x4xf32> to vector<16x4xf32>
    %134 = arith.addf %132, %133 : vector<16x4xf32>
    %135 = arith.negf %134 : vector<16x4xf32>
    %136 = math.exp %135 : vector<16x4xf32>
    %cst_33 = arith.constant 1.000000e+00 : f32
    %137 = vector.broadcast %cst_33 : f32 to vector<16x4xf32>
    %138 = arith.addf %137, %136 : vector<16x4xf32>
    %139 = arith.divf %137, %138 : vector<16x4xf32>
    %140 = vector.extract_strided_slice %122 {offsets = [32, 0], sizes = [16, 4], strides = [1, 1]} : vector<48x4xf32> to vector<16x4xf32>
    %141 = vector.extract_strided_slice %123 {offsets = [32, 0], sizes = [16, 4], strides = [1, 1]} : vector<48x4xf32> to vector<16x4xf32>
    %142 = arith.addf %141, %18 : vector<16x4xf32>
    %143 = arith.mulf %131, %142 : vector<16x4xf32>
    %144 = arith.addf %140, %143 : vector<16x4xf32>
    %145 = math.tanh %144 : vector<16x4xf32>
    %cst_34 = arith.constant 1.000000e+00 : f32
    %146 = vector.broadcast %cst_34 : f32 to vector<16x4xf32>
    %147 = arith.subf %146, %139 : vector<16x4xf32>
    %148 = arith.mulf %147, %145 : vector<16x4xf32>
    %149 = arith.mulf %139, %121 : vector<16x4xf32>
    %150 = arith.addf %148, %149 : vector<16x4xf32>
    %c3_i32 = arith.constant 3 : i32
    %151 = vector.broadcast %c3_i32 : i32 to vector<1x4xi32>
    %152 = arith.cmpi sgt, %0, %151 : vector<1x4xi32>
    %153 = vector.shape_cast %152 : vector<1x4xi1> to vector<1x4xi1>
    %154 = vector.broadcast %153 : vector<1x4xi1> to vector<16x4xi1>
    %155 = arith.select %154, %150, %121 : vector<16x4xi1>, vector<16x4xf32>
    %156 = vector.extract_strided_slice %14 {offsets = [0, 16], sizes = [48, 4], strides = [1, 1]} : vector<48x32xf32> to vector<48x4xf32>
    %cst_35 = arith.constant dense<0.000000e+00> : vector<48x4xf32>
    %157 = tpu.matmul %15, %155, %cst_35 {dimension_numbers = #tpu.dot_dimension_numbers<[1], [0], [0], [1], [0, 0, 1, 1], [], []>} : vector<48x16xf32>, vector<16x4xf32>, vector<48x4xf32> -> vector<48x4xf32>
    %158 = vector.extract_strided_slice %156 {offsets = [0, 0], sizes = [16, 4], strides = [1, 1]} : vector<48x4xf32> to vector<16x4xf32>
    %159 = vector.extract_strided_slice %157 {offsets = [0, 0], sizes = [16, 4], strides = [1, 1]} : vector<48x4xf32> to vector<16x4xf32>
    %160 = arith.addf %158, %159 : vector<16x4xf32>
    %161 = arith.negf %160 : vector<16x4xf32>
    %162 = math.exp %161 : vector<16x4xf32>
    %cst_36 = arith.constant 1.000000e+00 : f32
    %163 = vector.broadcast %cst_36 : f32 to vector<16x4xf32>
    %164 = arith.addf %163, %162 : vector<16x4xf32>
    %165 = arith.divf %163, %164 : vector<16x4xf32>
    %166 = vector.extract_strided_slice %156 {offsets = [16, 0], sizes = [16, 4], strides = [1, 1]} : vector<48x4xf32> to vector<16x4xf32>
    %167 = vector.extract_strided_slice %157 {offsets = [16, 0], sizes = [16, 4], strides = [1, 1]} : vector<48x4xf32> to vector<16x4xf32>
    %168 = arith.addf %166, %167 : vector<16x4xf32>
    %169 = arith.negf %168 : vector<16x4xf32>
    %170 = math.exp %169 : vector<16x4xf32>
    %cst_37 = arith.constant 1.000000e+00 : f32
    %171 = vector.broadcast %cst_37 : f32 to vector<16x4xf32>
    %172 = arith.addf %171, %170 : vector<16x4xf32>
    %173 = arith.divf %171, %172 : vector<16x4xf32>
    %174 = vector.extract_strided_slice %156 {offsets = [32, 0], sizes = [16, 4], strides = [1, 1]} : vector<48x4xf32> to vector<16x4xf32>
    %175 = vector.extract_strided_slice %157 {offsets = [32, 0], sizes = [16, 4], strides = [1, 1]} : vector<48x4xf32> to vector<16x4xf32>
    %176 = arith.addf %175, %18 : vector<16x4xf32>
    %177 = arith.mulf %165, %176 : vector<16x4xf32>
    %178 = arith.addf %174, %177 : vector<16x4xf32>
    %179 = math.tanh %178 : vector<16x4xf32>
    %cst_38 = arith.constant 1.000000e+00 : f32
    %180 = vector.broadcast %cst_38 : f32 to vector<16x4xf32>
    %181 = arith.subf %180, %173 : vector<16x4xf32>
    %182 = arith.mulf %181, %179 : vector<16x4xf32>
    %183 = arith.mulf %173, %155 : vector<16x4xf32>
    %184 = arith.addf %182, %183 : vector<16x4xf32>
    %c4_i32 = arith.constant 4 : i32
    %185 = vector.broadcast %c4_i32 : i32 to vector<1x4xi32>
    %186 = arith.cmpi sgt, %0, %185 : vector<1x4xi32>
    %187 = vector.shape_cast %186 : vector<1x4xi1> to vector<1x4xi1>
    %188 = vector.broadcast %187 : vector<1x4xi1> to vector<16x4xi1>
    %189 = arith.select %188, %184, %155 : vector<16x4xi1>, vector<16x4xf32>
    %190 = vector.extract_strided_slice %14 {offsets = [0, 20], sizes = [48, 4], strides = [1, 1]} : vector<48x32xf32> to vector<48x4xf32>
    %cst_39 = arith.constant dense<0.000000e+00> : vector<48x4xf32>
    %191 = tpu.matmul %15, %189, %cst_39 {dimension_numbers = #tpu.dot_dimension_numbers<[1], [0], [0], [1], [0, 0, 1, 1], [], []>} : vector<48x16xf32>, vector<16x4xf32>, vector<48x4xf32> -> vector<48x4xf32>
    %192 = vector.extract_strided_slice %190 {offsets = [0, 0], sizes = [16, 4], strides = [1, 1]} : vector<48x4xf32> to vector<16x4xf32>
    %193 = vector.extract_strided_slice %191 {offsets = [0, 0], sizes = [16, 4], strides = [1, 1]} : vector<48x4xf32> to vector<16x4xf32>
    %194 = arith.addf %192, %193 : vector<16x4xf32>
    %195 = arith.negf %194 : vector<16x4xf32>
    %196 = math.exp %195 : vector<16x4xf32>
    %cst_40 = arith.constant 1.000000e+00 : f32
    %197 = vector.broadcast %cst_40 : f32 to vector<16x4xf32>
    %198 = arith.addf %197, %196 : vector<16x4xf32>
    %199 = arith.divf %197, %198 : vector<16x4xf32>
    %200 = vector.extract_strided_slice %190 {offsets = [16, 0], sizes = [16, 4], strides = [1, 1]} : vector<48x4xf32> to vector<16x4xf32>
    %201 = vector.extract_strided_slice %191 {offsets = [16, 0], sizes = [16, 4], strides = [1, 1]} : vector<48x4xf32> to vector<16x4xf32>
    %202 = arith.addf %200, %201 : vector<16x4xf32>
    %203 = arith.negf %202 : vector<16x4xf32>
    %204 = math.exp %203 : vector<16x4xf32>
    %cst_41 = arith.constant 1.000000e+00 : f32
    %205 = vector.broadcast %cst_41 : f32 to vector<16x4xf32>
    %206 = arith.addf %205, %204 : vector<16x4xf32>
    %207 = arith.divf %205, %206 : vector<16x4xf32>
    %208 = vector.extract_strided_slice %190 {offsets = [32, 0], sizes = [16, 4], strides = [1, 1]} : vector<48x4xf32> to vector<16x4xf32>
    %209 = vector.extract_strided_slice %191 {offsets = [32, 0], sizes = [16, 4], strides = [1, 1]} : vector<48x4xf32> to vector<16x4xf32>
    %210 = arith.addf %209, %18 : vector<16x4xf32>
    %211 = arith.mulf %199, %210 : vector<16x4xf32>
    %212 = arith.addf %208, %211 : vector<16x4xf32>
    %213 = math.tanh %212 : vector<16x4xf32>
    %cst_42 = arith.constant 1.000000e+00 : f32
    %214 = vector.broadcast %cst_42 : f32 to vector<16x4xf32>
    %215 = arith.subf %214, %207 : vector<16x4xf32>
    %216 = arith.mulf %215, %213 : vector<16x4xf32>
    %217 = arith.mulf %207, %189 : vector<16x4xf32>
    %218 = arith.addf %216, %217 : vector<16x4xf32>
    %c5_i32 = arith.constant 5 : i32
    %219 = vector.broadcast %c5_i32 : i32 to vector<1x4xi32>
    %220 = arith.cmpi sgt, %0, %219 : vector<1x4xi32>
    %221 = vector.shape_cast %220 : vector<1x4xi1> to vector<1x4xi1>
    %222 = vector.broadcast %221 : vector<1x4xi1> to vector<16x4xi1>
    %223 = arith.select %222, %218, %189 : vector<16x4xi1>, vector<16x4xf32>
    %224 = vector.extract_strided_slice %14 {offsets = [0, 24], sizes = [48, 4], strides = [1, 1]} : vector<48x32xf32> to vector<48x4xf32>
    %cst_43 = arith.constant dense<0.000000e+00> : vector<48x4xf32>
    %225 = tpu.matmul %15, %223, %cst_43 {dimension_numbers = #tpu.dot_dimension_numbers<[1], [0], [0], [1], [0, 0, 1, 1], [], []>} : vector<48x16xf32>, vector<16x4xf32>, vector<48x4xf32> -> vector<48x4xf32>
    %226 = vector.extract_strided_slice %224 {offsets = [0, 0], sizes = [16, 4], strides = [1, 1]} : vector<48x4xf32> to vector<16x4xf32>
    %227 = vector.extract_strided_slice %225 {offsets = [0, 0], sizes = [16, 4], strides = [1, 1]} : vector<48x4xf32> to vector<16x4xf32>
    %228 = arith.addf %226, %227 : vector<16x4xf32>
    %229 = arith.negf %228 : vector<16x4xf32>
    %230 = math.exp %229 : vector<16x4xf32>
    %cst_44 = arith.constant 1.000000e+00 : f32
    %231 = vector.broadcast %cst_44 : f32 to vector<16x4xf32>
    %232 = arith.addf %231, %230 : vector<16x4xf32>
    %233 = arith.divf %231, %232 : vector<16x4xf32>
    %234 = vector.extract_strided_slice %224 {offsets = [16, 0], sizes = [16, 4], strides = [1, 1]} : vector<48x4xf32> to vector<16x4xf32>
    %235 = vector.extract_strided_slice %225 {offsets = [16, 0], sizes = [16, 4], strides = [1, 1]} : vector<48x4xf32> to vector<16x4xf32>
    %236 = arith.addf %234, %235 : vector<16x4xf32>
    %237 = arith.negf %236 : vector<16x4xf32>
    %238 = math.exp %237 : vector<16x4xf32>
    %cst_45 = arith.constant 1.000000e+00 : f32
    %239 = vector.broadcast %cst_45 : f32 to vector<16x4xf32>
    %240 = arith.addf %239, %238 : vector<16x4xf32>
    %241 = arith.divf %239, %240 : vector<16x4xf32>
    %242 = vector.extract_strided_slice %224 {offsets = [32, 0], sizes = [16, 4], strides = [1, 1]} : vector<48x4xf32> to vector<16x4xf32>
    %243 = vector.extract_strided_slice %225 {offsets = [32, 0], sizes = [16, 4], strides = [1, 1]} : vector<48x4xf32> to vector<16x4xf32>
    %244 = arith.addf %243, %18 : vector<16x4xf32>
    %245 = arith.mulf %233, %244 : vector<16x4xf32>
    %246 = arith.addf %242, %245 : vector<16x4xf32>
    %247 = math.tanh %246 : vector<16x4xf32>
    %cst_46 = arith.constant 1.000000e+00 : f32
    %248 = vector.broadcast %cst_46 : f32 to vector<16x4xf32>
    %249 = arith.subf %248, %241 : vector<16x4xf32>
    %250 = arith.mulf %249, %247 : vector<16x4xf32>
    %251 = arith.mulf %241, %223 : vector<16x4xf32>
    %252 = arith.addf %250, %251 : vector<16x4xf32>
    %c6_i32 = arith.constant 6 : i32
    %253 = vector.broadcast %c6_i32 : i32 to vector<1x4xi32>
    %254 = arith.cmpi sgt, %0, %253 : vector<1x4xi32>
    %255 = vector.shape_cast %254 : vector<1x4xi1> to vector<1x4xi1>
    %256 = vector.broadcast %255 : vector<1x4xi1> to vector<16x4xi1>
    %257 = arith.select %256, %252, %223 : vector<16x4xi1>, vector<16x4xf32>
    %258 = vector.extract_strided_slice %14 {offsets = [0, 28], sizes = [48, 4], strides = [1, 1]} : vector<48x32xf32> to vector<48x4xf32>
    %cst_47 = arith.constant dense<0.000000e+00> : vector<48x4xf32>
    %259 = tpu.matmul %15, %257, %cst_47 {dimension_numbers = #tpu.dot_dimension_numbers<[1], [0], [0], [1], [0, 0, 1, 1], [], []>} : vector<48x16xf32>, vector<16x4xf32>, vector<48x4xf32> -> vector<48x4xf32>
    %260 = vector.extract_strided_slice %258 {offsets = [0, 0], sizes = [16, 4], strides = [1, 1]} : vector<48x4xf32> to vector<16x4xf32>
    %261 = vector.extract_strided_slice %259 {offsets = [0, 0], sizes = [16, 4], strides = [1, 1]} : vector<48x4xf32> to vector<16x4xf32>
    %262 = arith.addf %260, %261 : vector<16x4xf32>
    %263 = arith.negf %262 : vector<16x4xf32>
    %264 = math.exp %263 : vector<16x4xf32>
    %cst_48 = arith.constant 1.000000e+00 : f32
    %265 = vector.broadcast %cst_48 : f32 to vector<16x4xf32>
    %266 = arith.addf %265, %264 : vector<16x4xf32>
    %267 = arith.divf %265, %266 : vector<16x4xf32>
    %268 = vector.extract_strided_slice %258 {offsets = [16, 0], sizes = [16, 4], strides = [1, 1]} : vector<48x4xf32> to vector<16x4xf32>
    %269 = vector.extract_strided_slice %259 {offsets = [16, 0], sizes = [16, 4], strides = [1, 1]} : vector<48x4xf32> to vector<16x4xf32>
    %270 = arith.addf %268, %269 : vector<16x4xf32>
    %271 = arith.negf %270 : vector<16x4xf32>
    %272 = math.exp %271 : vector<16x4xf32>
    %cst_49 = arith.constant 1.000000e+00 : f32
    %273 = vector.broadcast %cst_49 : f32 to vector<16x4xf32>
    %274 = arith.addf %273, %272 : vector<16x4xf32>
    %275 = arith.divf %273, %274 : vector<16x4xf32>
    %276 = vector.extract_strided_slice %258 {offsets = [32, 0], sizes = [16, 4], strides = [1, 1]} : vector<48x4xf32> to vector<16x4xf32>
    %277 = vector.extract_strided_slice %259 {offsets = [32, 0], sizes = [16, 4], strides = [1, 1]} : vector<48x4xf32> to vector<16x4xf32>
    %278 = arith.addf %277, %18 : vector<16x4xf32>
    %279 = arith.mulf %267, %278 : vector<16x4xf32>
    %280 = arith.addf %276, %279 : vector<16x4xf32>
    %281 = math.tanh %280 : vector<16x4xf32>
    %cst_50 = arith.constant 1.000000e+00 : f32
    %282 = vector.broadcast %cst_50 : f32 to vector<16x4xf32>
    %283 = arith.subf %282, %275 : vector<16x4xf32>
    %284 = arith.mulf %283, %281 : vector<16x4xf32>
    %285 = arith.mulf %275, %257 : vector<16x4xf32>
    %286 = arith.addf %284, %285 : vector<16x4xf32>
    %c7_i32 = arith.constant 7 : i32
    %287 = vector.broadcast %c7_i32 : i32 to vector<1x4xi32>
    %288 = arith.cmpi sgt, %0, %287 : vector<1x4xi32>
    %289 = vector.shape_cast %288 : vector<1x4xi1> to vector<1x4xi1>
    %290 = vector.broadcast %289 : vector<1x4xi1> to vector<16x4xi1>
    %291 = arith.select %290, %286, %257 : vector<16x4xi1>, vector<16x4xf32>
    %292 = vector.broadcast %1 : i32 to vector<1x4xi32>
    %293 = arith.cmpi eq, %0, %292 : vector<1x4xi32>
    %cst_51 = arith.constant 0.000000e+00 : f32
    %294 = vector.shape_cast %293 : vector<1x4xi1> to vector<1x4xi1>
    %295 = vector.broadcast %294 : vector<1x4xi1> to vector<16x4xi1>
    %296 = vector.broadcast %cst_51 : f32 to vector<16x4xf32>
    %297 = arith.select %295, %291, %296 : vector<16x4xi1>, vector<16x4xf32>
    %c0_52 = arith.constant 0 : index
    %c0_53 = arith.constant 0 : index
    %298 = vector.load %arg10[%c0_52, %c0_53] : memref<2x16xf32, #tpu.memory_space<vmem>>, vector<2x16xf32>
    %cst_54 = arith.constant dense<0.000000e+00> : vector<2x4xf32>
    %299 = tpu.matmul %298, %297, %cst_54 {dimension_numbers = #tpu.dot_dimension_numbers<[1], [0], [0], [1], [0, 0, 1, 1], [], []>} : vector<2x16xf32>, vector<16x4xf32>, vector<2x4xf32> -> vector<2x4xf32>
    %c0_55 = arith.constant 0 : index
    %c0_56 = arith.constant 0 : index
    %300 = vector.load %arg11[%c0_55, %c0_56] : memref<2x1xf32, #tpu.memory_space<vmem>>, vector<2x1xf32>
    %301 = vector.broadcast %300 : vector<2x1xf32> to vector<2x4xf32>
    %302 = arith.addf %299, %301 : vector<2x4xf32>
    %c0_57 = arith.constant 0 : index
    %c0_58 = arith.constant 0 : index
    %303 = vector.load %arg12[%c0_57, %c0_58] : memref<2x4xf32, #tpu.memory_space<vmem>>, vector<2x4xf32>
    tpu.vector_store %arg12[%c0_57, %c0_58], %302 {strides = array<i32>} : memref<2x4xf32, #tpu.memory_space<vmem>>, vector<2x4xf32>,
    return
  }
  func.func @transform_0(%arg0: i32, %arg1: memref<1xi32, #tpu.memory_space<smem>>) -> (i32, i32, i32) {
    %c0_i32 = arith.constant 0 : i32
    %c0_i32_0 = arith.constant 0 : i32
    %c0_i32_1 = arith.constant 0 : i32
    return %c0_i32, %arg0, %c0_i32_0 : i32, i32, i32
  }
  func.func @transform_1(%arg0: i32, %arg1: memref<1xi32, #tpu.memory_space<smem>>) -> (i32, i32) {
    %c0_i32 = arith.constant 0 : i32
    %c0_i32_0 = arith.constant 0 : i32
    return %c0_i32, %arg0 : i32, i32
  }
  func.func @transform_2(%arg0: i32, %arg1: memref<1xi32, #tpu.memory_space<smem>>) -> (i32, i32) {
    %c0_i32 = arith.constant 0 : i32
    %c0_i32_0 = arith.constant 0 : i32
    %c0_i32_1 = arith.constant 0 : i32
    return %c0_i32, %c0_i32_0 : i32, i32
  }
  func.func @transform_3(%arg0: i32, %arg1: memref<1xi32, #tpu.memory_space<smem>>) -> (i32, i32) {
    %c0_i32 = arith.constant 0 : i32
    %c0_i32_0 = arith.constant 0 : i32
    %c0_i32_1 = arith.constant 0 : i32
    return %c0_i32, %c0_i32_0 : i32, i32
  }
  func.func @transform_4(%arg0: i32, %arg1: memref<1xi32, #tpu.memory_space<smem>>) -> (i32, i32) {
    %c0_i32 = arith.constant 0 : i32
    %c0_i32_0 = arith.constant 0 : i32
    %c0_i32_1 = arith.constant 0 : i32
    return %c0_i32, %c0_i32_0 : i32, i32
  }
  func.func @transform_5(%arg0: i32, %arg1: memref<1xi32, #tpu.memory_space<smem>>) -> (i32, i32) {
    %c0_i32 = arith.constant 0 : i32
    %c0_i32_0 = arith.constant 0 : i32
    %c0_i32_1 = arith.constant 0 : i32
    return %c0_i32, %c0_i32_0 : i32, i32
  }
  func.func @transform_6(%arg0: i32, %arg1: memref<1xi32, #tpu.memory_space<smem>>) -> (i32, i32) {
    %c0_i32 = arith.constant 0 : i32
    %c0_i32_0 = arith.constant 0 : i32
    %c0_i32_1 = arith.constant 0 : i32
    return %c0_i32, %c0_i32_0 : i32, i32
  }
  func.func @transform_7(%arg0: i32, %arg1: memref<1xi32, #tpu.memory_space<smem>>) -> (i32, i32) {
    %c0_i32 = arith.constant 0 : i32
    %c0_i32_0 = arith.constant 0 : i32
    %c0_i32_1 = arith.constant 0 : i32
    return %c0_i32, %c0_i32_0 : i32, i32
  }
  func.func @transform_8(%arg0: i32, %arg1: memref<1xi32, #tpu.memory_space<smem>>) -> (i32, i32) {
    %c0_i32 = arith.constant 0 : i32
    %c0_i32_0 = arith.constant 0 : i32
    %c0_i32_1 = arith.constant 0 : i32
    return %c0_i32, %c0_i32_0 : i32, i32
  }
  func.func @transform_9(%arg0: i32, %arg1: memref<1xi32, #tpu.memory_space<smem>>) -> (i32, i32) {
    %c0_i32 = arith.constant 0 : i32
    %c0_i32_0 = arith.constant 0 : i32
    %c0_i32_1 = arith.constant 0 : i32
    return %c0_i32, %c0_i32_0 : i32, i32
  }
  func.func @transform_10(%arg0: i32, %arg1: memref<1xi32, #tpu.memory_space<smem>>) -> (i32, i32) {
    %c0_i32 = arith.constant 0 : i32
    %c0_i32_0 = arith.constant 0 : i32
    return %c0_i32, %arg0 : i32, i32
  }
}

</mosaic_0001>

<llo_original>
// kernel: tpu_custom_call.1
$region0: #{tpu_custom_call.1}
  #allocation0 [shape = 'u32[]', space=smem, size = 0x4, offset = 0x4, fixed_abs, tag = 'smem constant byte address 0x4 - core index']
  #allocation1 [shape = 'u32[72,128]{1,0:T(1,128)}', space=vmem, size = 0x9000, scoped, tag = 'internal scratch']
  #allocation2 [shape = 's32[1]{0}', space=sflag, size = 0x4, scoped, tag = 'scoped memory for tpu_custom_call.1']
  #allocation3 [shape = 's32[1]{0:T(128)S(6)}', space=smem, size = 0x200, scoped, tag = 'prefetched SMEM operand 0']
  %s0 = inlined_call_operand.<no memory space> [shape: s32[1], index: 0, kind: input, shape index: {}]
  %s1 = inlined_call_operand.vmem [shape: bf16[8,4,40], index: 1, kind: input, shape index: {}]
  %s2 = inlined_call_operand.vmem [shape: s32[1,4], index: 2, kind: input, shape index: {}]
  %s3 = inlined_call_operand.vmem [shape: bf16[40,32], index: 3, kind: input, shape index: {}]
  %s4 = inlined_call_operand.vmem [shape: f32[1,32], index: 4, kind: input, shape index: {}]
  %s5 = inlined_call_operand.vmem [shape: f32[48,32], index: 5, kind: input, shape index: {}]
  %s6 = inlined_call_operand.vmem [shape: f32[48,1], index: 6, kind: input, shape index: {}]
  %s7 = inlined_call_operand.vmem [shape: f32[48,16], index: 7, kind: input, shape index: {}]
  %s8 = inlined_call_operand.vmem [shape: f32[16,1], index: 8, kind: input, shape index: {}]
  %s9 = inlined_call_operand.vmem [shape: f32[2,16], index: 9, kind: input, shape index: {}]
  %s10 = inlined_call_operand.vmem [shape: f32[2,1], index: 10, kind: input, shape index: {}]
  %s11 = inlined_call_operand.hbm [shape: f32[2,4], index: 11, kind: output, shape index: {}]
  %s12 = sld [smem:[#allocation0]]
  $region50: #{tpu_custom_call.1} parent=0
    _
  %s14 = ssub.s32 1, %s12
  %s15 = scalar_select 0, %s14, %s12
  %16 = sst [smem:[#allocation3]] %s0
  $region1: #{tpu_custom_call.1} parent=0
    #allocation4 [shape = 'u8[1024]{0}', space=vmem, size = 0x400, scoped, tag = 'output window, operand 0, single buffered']
    #allocation5 [shape = 's32[1]{0}', space=sflag, size = 0x4, scoped, tag = 'scoped memory for tpu_custom_call.1']
    %17 = vsyncpa [#allocation5], 0
    // Predicated region
    $region2: #{tpu_custom_call.1} parent=1 // pred_check
      _
    $region3: #{tpu_custom_call.1} parent=1 // pred_check_branch
      %19 = sbr.rel (0) target = $region5
    $region4: #{tpu_custom_call.1} parent=1 // pred_region
      _
    $region5: #{tpu_custom_call.1} parent=1 // pred_fallthru
      _
    // Predicated region
    $region6: #{tpu_custom_call.1} parent=1 // pred_check
      _
    $region7: #{tpu_custom_call.1} parent=1 // pred_check_branch
      %21 = sbr.rel (0) target = $region9
    $region8: #{tpu_custom_call.1} parent=1 // pred_region
      _
    $region9: #{tpu_custom_call.1} parent=1 // pred_fallthru
      _
    // Predicated region
    $region10: #{tpu_custom_call.1} parent=1 // pred_check
      _
    $region11: #{tpu_custom_call.1} parent=1 // pred_check_branch
      %23 = sbr.rel (0) target = $region13
    $region12: #{tpu_custom_call.1} parent=1 // pred_region
      _
    $region13: #{tpu_custom_call.1} parent=1 // pred_fallthru
      _
    // Predicated region
    $region14: #{tpu_custom_call.1} parent=1 // pred_check
      _
    $region15: #{tpu_custom_call.1} parent=1 // pred_check_branch
      %25 = sbr.rel (0) target = $region17
    $region16: #{tpu_custom_call.1} parent=1 // pred_region
      _
    $region17: #{tpu_custom_call.1} parent=1 // pred_fallthru
      _
    // Predicated region
    $region18: #{tpu_custom_call.1} parent=1 // pred_check
      _
    $region19: #{tpu_custom_call.1} parent=1 // pred_check_branch
      %27 = sbr.rel (0) target = $region21
    $region20: #{tpu_custom_call.1} parent=1 // pred_region
      _
    $region21: #{tpu_custom_call.1} parent=1 // pred_fallthru
      _
    // Predicated region
    $region22: #{tpu_custom_call.1} parent=1 // pred_check
      _
    $region23: #{tpu_custom_call.1} parent=1 // pred_check_branch
      %29 = sbr.rel (0) target = $region25
    $region24: #{tpu_custom_call.1} parent=1 // pred_region
      _
    $region25: #{tpu_custom_call.1} parent=1 // pred_fallthru
      _
    // Predicated region
    $region26: #{tpu_custom_call.1} parent=1 // pred_check
      _
    $region27: #{tpu_custom_call.1} parent=1 // pred_check_branch
      %31 = sbr.rel (0) target = $region29
    $region28: #{tpu_custom_call.1} parent=1 // pred_region
      _
    $region29: #{tpu_custom_call.1} parent=1 // pred_fallthru
      _
    // Predicated region
    $region30: #{tpu_custom_call.1} parent=1 // pred_check
      _
    $region31: #{tpu_custom_call.1} parent=1 // pred_check_branch
      %33 = sbr.rel (0) target = $region33
    $region32: #{tpu_custom_call.1} parent=1 // pred_region
      _
    $region33: #{tpu_custom_call.1} parent=1 // pred_fallthru
      _
    // Predicated region
    $region34: #{tpu_custom_call.1} parent=1 // pred_check
      _
    $region35: #{tpu_custom_call.1} parent=1 // pred_check_branch
      %35 = sbr.rel (0) target = $region37
    $region36: #{tpu_custom_call.1} parent=1 // pred_region
      _
    $region37: #{tpu_custom_call.1} parent=1 // pred_fallthru
      _
    // Predicated region
    $region38: #{tpu_custom_call.1} parent=1 // pred_check
      _
    $region39: #{tpu_custom_call.1} parent=1 // pred_check_branch
      %37 = sbr.rel (0) target = $region41
    $region40: #{tpu_custom_call.1} parent=1 // pred_region
      _
    $region41: #{tpu_custom_call.1} parent=1 // pred_fallthru
      _
    %v39 = vld [vmem:[%s2] sm:$0x1]
    %s40 = sld [smem:[#allocation3]]
    %v41 = vld [vmem:[%s1] sm:$0x3]
    %v42 = vld [vmem:[%s1 + $0x2] sm:$0x3]
    %v43 = vld [vmem:[%s1 + $0x4] sm:$0x3]
    %v44 = vld [vmem:[%s1 + $0x6] sm:$0x3]
    %v45 = vld [vmem:[%s1 + $0x8] sm:$0x3]
    %v46 = vld [vmem:[%s1 + $0xa] sm:$0x3]
    %v47 = vld [vmem:[%s1 + $0xc] sm:$0x3]
    %v48 = vld [vmem:[%s1 + $0xe] sm:$0x3]
    %v49 = vld [vmem:[%s3] sm:$0xf]
    %v50 = vld [vmem:[%s3 + $0x4] sm:$0xf]
    %v51 = vld [vmem:[%s3 + $0x8] sm:$0xf]
    %v52 = vld [vmem:[%s3 + $0xc] sm:$0xf]
    %v53 = vld [vmem:[%s3 + $0x10] sm:$0xf]
    %v54 = vld [vmem:[%s4] sm:$0x1]
    %v56 = vperm.slane %v54, 0
    %59 = vst [vmem:[#allocation1] ss:$4 sm:$0xff] %v41
    %s61 = scalar_lea.vmem [#allocation1], 1
    %62 = vst [vmem:[%s61] ss:$4 sm:$0xff] %v42
    %s64 = scalar_lea.vmem [#allocation1], 2
    %65 = vst [vmem:[%s64] ss:$4 sm:$0xff] %v43
    %s67 = scalar_lea.vmem [#allocation1], 3
    %68 = vst [vmem:[%s67] ss:$4 sm:$0xff] %v44
    %s70 = scalar_lea.vmem [#allocation1], 32
    %71 = vst [vmem:[%s70] ss:$4 sm:$0xff] %v45
    %s73 = scalar_lea.vmem [#allocation1], 33
    %74 = vst [vmem:[%s73] ss:$4 sm:$0xff] %v46
    %s76 = scalar_lea.vmem [#allocation1], 34
    %77 = vst [vmem:[%s76] ss:$4 sm:$0xff] %v47
    %s79 = scalar_lea.vmem [#allocation1], 35
    %80 = vst [vmem:[%s79] ss:$4 sm:$0xff] %v48
    %v81 = vld.sshfl [vmem:[#allocation1] sm:$0xff pattern:$0x73625140]
    %v82 = vld.sshfl [vmem:[#allocation1 + $0x20] sm:$0xff pattern:$0x73625140]
    %v88 = vunpack.c.l.b16 %v49
    %v89 = vunpack.c.l.b16 %v50
    %v90 = vunpack.c.l.b16 %v51
    %v91 = vunpack.c.l.b16 %v52
    %v92 = vunpack.c.l.b16 %v53
    %v93 = vpack.c.b16 %v89, %v88
    %v94 = vpack.c.b16 %v91, %v90
    %v95 = vpack.c.b16 %v92, %v92
    %vm98 = vcmask 326656
    %v99 = vsel %vm98, %v81, 0
    %v101 = vsel %vm98, %v82, 0
    %vm103 = vcmask 1043456
    %v105 = vsel %vm103, %v95, 0
    %107 = vmatpush.bf16.msra.mxu0 0
    %108 = vmatpush.bf16.msra.mxu0 0
    %109 = vmatpush.bf16.msra.mxu0 0
    %110 = vmatpush.bf16.msra.mxu0 0
    %111 = vmatpush.bf16.msra.mxu0 0
    %112 = vmatpush.bf16.msra.mxu0 %v105
    %113 = vmatpush.bf16.msra.mxu0 %v94
    %114 = vmatpush.bf16.msra.mxu0 %v93
    %115 = vmatmul.bf16.gmra.mxu0 %v99
    %v116 = vpop.f32.mrf.mxu0
    %v117 = vadd.f32 %v56, %v116
    %v118 = vpop.f32.mrf.mxu0
    %v119 = vadd.f32 %v56, %v118
    %120 = vmatmul.bf16.gmra.mxu0 %v101
    %v121 = vpop.f32.mrf.mxu0
    %v122 = vadd.f32 %v56, %v121
    %v123 = vpop.f32.mrf.mxu0
    %v124 = vadd.f32 %v56, %v123
    %125 = vdwg.mxu0
    %v126 = vtanh.pop %v117
    %v127 = vtanh.pop %v119
    %v128 = vtanh.pop %v122
    %v129 = vtanh.pop %v124
    %v130 = vld [vmem:[%s5] sm:$0xff]
    %v131 = vld [vmem:[%s5 + $0x8] sm:$0xff]
    %v132 = vld [vmem:[%s5 + $0x10] sm:$0xff]
    %v133 = vld [vmem:[%s5 + $0x18] sm:$0xff]
    %v134 = vld [vmem:[%s5 + $0x20] sm:$0xff]
    %v135 = vld [vmem:[%s5 + $0x28] sm:$0xff]
    %v136 = vld [vmem:[%s6] sm:$0xff]
    %v137 = vld [vmem:[%s6 + $0x8] sm:$0xff]
    %v138 = vld [vmem:[%s6 + $0x10] sm:$0xff]
    %v139 = vld [vmem:[%s6 + $0x18] sm:$0xff]
    %v140 = vld [vmem:[%s6 + $0x20] sm:$0xff]
    %v141 = vld [vmem:[%s6 + $0x28] sm:$0xff]
    %143 = vset.pattern.permute.xlu0 0
    %144 = vperm.xlu0 %143, %v136
    %v145 = vpop.permute.xlu0 %144
    %148 = vset.pattern.permute.xlu0 0
    %149 = vperm.xlu0 %148, %v137
    %v150 = vpop.permute.xlu0 %149
    %153 = vset.pattern.permute.xlu0 0
    %154 = vperm.xlu0 %153, %v138
    %v155 = vpop.permute.xlu0 %154
    %158 = vset.pattern.permute.xlu0 0
    %159 = vperm.xlu0 %158, %v139
    %v160 = vpop.permute.xlu0 %159
    %163 = vset.pattern.permute.xlu0 0
    %164 = vperm.xlu0 %163, %v140
    %v165 = vpop.permute.xlu0 %164
    %168 = vset.pattern.permute.xlu0 0
    %169 = vperm.xlu0 %168, %v141
    %v170 = vpop.permute.xlu0 %169
    %vm172 = vcmask 261120
    %v174 = vsel %vm172, %v130, 0
    %v177 = vsel %vm172, %v131, 0
    %v180 = vsel %vm172, %v132, 0
    %v183 = vsel %vm172, %v133, 0
    %v186 = vsel %vm172, %v134, 0
    %v189 = vsel %vm172, %v135, 0
    %v192 = vsel %vm172, %v126, 0
    %v195 = vsel %vm172, %v127, 0
    %v198 = vsel %vm172, %v128, 0
    %v201 = vsel %vm172, %v129, 0
    %203 = vmatpush.xpose.msra.mxu0 0.0
    %204 = vmatpush.xpose.msra.mxu0 0.0
    %205 = vmatpush.xpose.msra.mxu0 0.0
    %206 = vmatpush.xpose.msra.mxu0 0.0
    %207 = vmatpush.xpose.msra.mxu0 0.0
    %208 = vmatpush.xpose.msra.mxu0 0.0
    %209 = vmatpush.xpose.msra.mxu0 0.0
    %210 = vmatpush.xpose.msra.mxu0 0.0
    %211 = vmatpush.xpose.msra.mxu0 0.0
    %212 = vmatpush.xpose.msra.mxu0 0.0
    %213 = vmatpush.xpose.msra.mxu0 0.0
    %214 = vmatpush.xpose.msra.mxu0 0.0
    %215 = vmatpush.xpose.msra.mxu0 %v201
    %216 = vmatpush.xpose.msra.mxu0 %v198
    %217 = vmatpush.xpose.msra.mxu0 %v195
    %218 = vmatpush.xpose.msra.mxu0 %v192
    %219 = vmatmul.f32.gmra.mxu0 %v174
    %v220 = vpop.f32.mrf.mxu0
    %v221 = vadd.f32 %v145, %v220
    %222 = vmatmul.f32.gmra.mxu0 %v177
    %v223 = vpop.f32.mrf.mxu0
    %v224 = vadd.f32 %v150, %v223
    %225 = vmatmul.f32.gmra.mxu0 %v180
    %v226 = vpop.f32.mrf.mxu0
    %v227 = vadd.f32 %v155, %v226
    %228 = vmatmul.f32.gmra.mxu0 %v183
    %v229 = vpop.f32.mrf.mxu0
    %v230 = vadd.f32 %v160, %v229
    %231 = vmatmul.f32.gmra.mxu0 %v186
    %v232 = vpop.f32.mrf.mxu0
    %v233 = vadd.f32 %v165, %v232
    %234 = vmatmul.f32.gmra.mxu0 %v189
    %v235 = vpop.f32.mrf.mxu0
    %v236 = vadd.f32 %v170, %v235
    %237 = vdwg.mxu0
    %v238 = vld [vmem:[%s7] sm:$0xff]
    %v239 = vld [vmem:[%s7 + $0x8] sm:$0xff]
    %v240 = vld [vmem:[%s7 + $0x10] sm:$0xff]
    %v241 = vld [vmem:[%s7 + $0x18] sm:$0xff]
    %v242 = vld [vmem:[%s7 + $0x20] sm:$0xff]
    %v243 = vld [vmem:[%s7 + $0x28] sm:$0xff]
    %v244 = vld [vmem:[%s8] sm:$0xff]
    %v245 = vld [vmem:[%s8 + $0x8] sm:$0xff]
    %247 = vset.pattern.permute.xlu0 0
    %248 = vperm.xlu0 %247, %v244
    %v249 = vpop.permute.xlu0 %248
    %252 = vset.pattern.permute.xlu0 0
    %253 = vperm.xlu0 %252, %v245
    %v254 = vpop.permute.xlu0 %253
    %vm256 = vcmask 130048
    %v258 = vsel %vm256, %v238, 0
    %v261 = vsel %vm256, %v239, 0
    %v264 = vsel %vm256, %v240, 0
    %v267 = vsel %vm256, %v241, 0
    %v270 = vsel %vm256, %v242, 0
    %v273 = vsel %vm256, %v243, 0
    %275 = vmatpush.msra.mxu0 0.0
    %276 = vmatpush.msra.mxu0 0.0
    %277 = vmatpush.msra.mxu0 0.0
    %278 = vmatpush.msra.mxu0 0.0
    %279 = vmatpush.msra.mxu0 0.0
    %280 = vmatpush.msra.mxu0 0.0
    %281 = vmatpush.msra.mxu0 0.0
    %282 = vmatpush.msra.mxu0 0.0
    %283 = vmatpush.msra.mxu0 0.0
    %284 = vmatpush.msra.mxu0 0.0
    %285 = vmatpush.msra.mxu0 0.0
    %286 = vmatpush.msra.mxu0 0.0
    %287 = vmatpush.msra.mxu0 0.0
    %288 = vmatpush.msra.mxu0 0.0
    %289 = vmatpush.msra.mxu0 0.0
    %290 = vmatpush.msra.mxu0 0.0
    %291 = vmatmul.f32.gmra.mxu0 %v258
    %v292 = vpop.f32.mrf.mxu0
    %v293 = vadd.f32 0.0, %v292
    %294 = vmatmul.f32.gmra.mxu0 %v261
    %v295 = vpop.f32.mrf.mxu0
    %v296 = vadd.f32 0.0, %v295
    %297 = vmatmul.f32.gmra.mxu0 %v264
    %v298 = vpop.f32.mrf.mxu0
    %v299 = vadd.f32 0.0, %v298
    %300 = vmatmul.f32.gmra.mxu0 %v267
    %v301 = vpop.f32.mrf.mxu0
    %v302 = vadd.f32 0.0, %v301
    %303 = vmatmul.f32.gmra.mxu0 %v270
    %v304 = vpop.f32.mrf.mxu0
    %v305 = vadd.f32 0.0, %v304
    %306 = vmatmul.f32.gmra.mxu0 %v273
    %v307 = vpop.f32.mrf.mxu0
    %v308 = vadd.f32 0.0, %v307
    %309 = vdwg.mxu0
    %v310 = vadd.f32 %v221, %v293
    %v311 = vadd.f32 %v224, %v296
    %v312 = vxor.u32 %v310, 2147483648
    %v313 = vxor.u32 %v311, 2147483648
    %v314 = vmul.f32 %v312, 1.442695
    %v315 = vpow.pop %v314
    %v316 = vmul.f32 %v313, 1.442695
    %v317 = vpow.pop %v316
    %v318 = vadd.f32 %v315, 1.0
    %v319 = vadd.f32 %v317, 1.0
    %v320 = vrcp.pop %v318
    %v321 = vmul.f32 %v318, %v320
    %v322 = vsub.f32 1.0, %v321
    %v323 = vmul.f32 %v320, %v322
    %v324 = vadd.f32 %v320, %v323
    %vm325 = vweird.f32 %v318
    %vm326 = vweird.f32 %v320
    %vm327 = vmor %vm325, %vm326
    %v328 = vsel %vm327, %v320, %v324
    %v329 = vand.u32 2147483647, %v318
    %vm330 = vcmp.eq.f32.partialorder %v329, 8.507059e+37
    %v331 = vand.u32 %v318, 2147483648
    %v332 = vor.u32 1.1754944e-38, %v331
    %v333 = vsel %vm330, %v332, %v328
    %v334 = vmul.f32 1.0, %v333
    %v335 = vrcp.pop %v319
    %v336 = vmul.f32 %v319, %v335
    %v337 = vsub.f32 1.0, %v336
    %v338 = vmul.f32 %v335, %v337
    %v339 = vadd.f32 %v335, %v338
    %vm340 = vweird.f32 %v319
    %vm341 = vweird.f32 %v335
    %vm342 = vmor %vm340, %vm341
    %v343 = vsel %vm342, %v335, %v339
    %v344 = vand.u32 2147483647, %v319
    %vm345 = vcmp.eq.f32.partialorder %v344, 8.507059e+37
    %v346 = vand.u32 %v319, 2147483648
    %v347 = vor.u32 1.1754944e-38, %v346
    %v348 = vsel %vm345, %v347, %v343
    %v349 = vmul.f32 1.0, %v348
    %v350 = vadd.f32 %v227, %v299
    %v351 = vadd.f32 %v230, %v302
    %v352 = vxor.u32 %v350, 2147483648
    %v353 = vxor.u32 %v351, 2147483648
    %v354 = vmul.f32 %v352, 1.442695
    %v355 = vpow.pop %v354
    %v356 = vmul.f32 %v353, 1.442695
    %v357 = vpow.pop %v356
    %v358 = vadd.f32 %v355, 1.0
    %v359 = vadd.f32 %v357, 1.0
    %v360 = vrcp.pop %v358
    %v361 = vmul.f32 %v358, %v360
    %v362 = vsub.f32 1.0, %v361
    %v363 = vmul.f32 %v360, %v362
    %v364 = vadd.f32 %v360, %v363
    %vm365 = vweird.f32 %v358
    %vm366 = vweird.f32 %v360
    %vm367 = vmor %vm365, %vm366
    %v368 = vsel %vm367, %v360, %v364
    %v369 = vand.u32 2147483647, %v358
    %vm370 = vcmp.eq.f32.partialorder %v369, 8.507059e+37
    %v371 = vand.u32 %v358, 2147483648
    %v372 = vor.u32 1.1754944e-38, %v371
    %v373 = vsel %vm370, %v372, %v368
    %v374 = vmul.f32 1.0, %v373
    %v375 = vrcp.pop %v359
    %v376 = vmul.f32 %v359, %v375
    %v377 = vsub.f32 1.0, %v376
    %v378 = vmul.f32 %v375, %v377
    %v379 = vadd.f32 %v375, %v378
    %vm380 = vweird.f32 %v359
    %vm381 = vweird.f32 %v375
    %vm382 = vmor %vm380, %vm381
    %v383 = vsel %vm382, %v375, %v379
    %v384 = vand.u32 2147483647, %v359
    %vm385 = vcmp.eq.f32.partialorder %v384, 8.507059e+37
    %v386 = vand.u32 %v359, 2147483648
    %v387 = vor.u32 1.1754944e-38, %v386
    %v388 = vsel %vm385, %v387, %v383
    %v389 = vmul.f32 1.0, %v388
    %v390 = vadd.f32 %v305, %v249
    %v391 = vadd.f32 %v308, %v254
    %v392 = vmul.f32 %v334, %v390
    %v393 = vmul.f32 %v349, %v391
    %v394 = vadd.f32 %v233, %v392
    %v395 = vadd.f32 %v236, %v393
    %v396 = vtanh.pop %v394
    %v397 = vtanh.pop %v395
    %v398 = vsub.f32 1.0, %v374
    %v399 = vsub.f32 1.0, %v389
    %v400 = vmul.f32 %v398, %v396
    %v401 = vmul.f32 %v399, %v397
    %v402 = vmul.f32 %v374, 0.0
    %v403 = vmul.f32 %v389, 0.0
    %v404 = vadd.f32 %v400, %v402
    %v405 = vadd.f32 %v401, %v403
    %vm406 = vcmp.gt.s32.totalorder %v39, 0
    %v407 = vsel %vm406, 1, 0
    %v408 = vperm.slane %v407, 0
    %vm409 = vcmp.eq.s32.totalorder %v408, 1
    %v410 = vsel %vm409, %v404, 0.0
    %v411 = vsel %vm409, %v405, 0.0
    %412 = vmatpush.msra.mxu0 0.0
    %413 = vmatpush.msra.mxu0 0.0
    %414 = vmatpush.msra.mxu0 0.0
    %415 = vmatpush.msra.mxu0 0.0
    %416 = vmatpush.msra.mxu0 0.0
    %417 = vmatpush.msra.mxu0 0.0
    %418 = vmatpush.msra.mxu0 0.0
    %419 = vmatpush.msra.mxu0 0.0
    %420 = vmatpush.msra.mxu0 0.0
    %421 = vmatpush.msra.mxu0 0.0
    %422 = vmatpush.msra.mxu0 0.0
    %423 = vmatpush.msra.mxu0 0.0
    %424 = vmatpush.msra.mxu0 0.0
    %425 = vmatpush.msra.mxu0 0.0
    %426 = vmatpush.msra.mxu0 %v411
    %427 = vmatpush.msra.mxu0 %v410
    %428 = vmatmul.f32.gmra.mxu0 %v258
    %v429 = vpop.f32.mrf.mxu0
    %v430 = vadd.f32 0.0, %v429
    %431 = vmatmul.f32.gmra.mxu0 %v261
    %v432 = vpop.f32.mrf.mxu0
    %v433 = vadd.f32 0.0, %v432
    %434 = vmatmul.f32.gmra.mxu0 %v264
    %v435 = vpop.f32.mrf.mxu0
    %v436 = vadd.f32 0.0, %v435
    %437 = vmatmul.f32.gmra.mxu0 %v267
    %v438 = vpop.f32.mrf.mxu0
    %v439 = vadd.f32 0.0, %v438
    %440 = vmatmul.f32.gmra.mxu0 %v270
    %v441 = vpop.f32.mrf.mxu0
    %v442 = vadd.f32 0.0, %v441
    %443 = vmatmul.f32.gmra.mxu0 %v273
    %v444 = vpop.f32.mrf.mxu0
    %v445 = vadd.f32 0.0, %v444
    %446 = vdwg.mxu0
    %449 = vrot.lane.b32.xlu0 %v430, 4
    %v450 = vpop.permute.xlu0 %449
    %451 = vrot.lane.b32.xlu0 %v433, 4
    %v452 = vpop.permute.xlu0 %451
    %v455 = vadd.f32 %v221, %v450
    %v456 = vadd.f32 %v224, %v452
    %v457 = vxor.u32 %v455, 2147483648
    %v458 = vxor.u32 %v456, 2147483648
    %v459 = vmul.f32 %v457, 1.442695
    %v460 = vpow.pop %v459
    %v461 = vmul.f32 %v458, 1.442695
    %v462 = vpow.pop %v461
    %v463 = vadd.f32 %v460, 1.0
    %v464 = vadd.f32 %v462, 1.0
    %v465 = vrcp.pop %v463
    %v466 = vmul.f32 %v463, %v465
    %v467 = vsub.f32 1.0, %v466
    %v468 = vmul.f32 %v465, %v467
    %v469 = vadd.f32 %v465, %v468
    %vm470 = vweird.f32 %v463
    %vm471 = vweird.f32 %v465
    %vm472 = vmor %vm470, %vm471
    %v473 = vsel %vm472, %v465, %v469
    %v474 = vand.u32 2147483647, %v463
    %vm475 = vcmp.eq.f32.partialorder %v474, 8.507059e+37
    %v476 = vand.u32 %v463, 2147483648
    %v477 = vor.u32 1.1754944e-38, %v476
    %v478 = vsel %vm475, %v477, %v473
    %v479 = vmul.f32 1.0, %v478
    %v480 = vrcp.pop %v464
    %v481 = vmul.f32 %v464, %v480
    %v482 = vsub.f32 1.0, %v481
    %v483 = vmul.f32 %v480, %v482
    %v484 = vadd.f32 %v480, %v483
    %vm485 = vweird.f32 %v464
    %vm486 = vweird.f32 %v480
    %vm487 = vmor %vm485, %vm486
    %v488 = vsel %vm487, %v480, %v484
    %v489 = vand.u32 2147483647, %v464
    %vm490 = vcmp.eq.f32.partialorder %v489, 8.507059e+37
    %v491 = vand.u32 %v464, 2147483648
    %v492 = vor.u32 1.1754944e-38, %v491
    %v493 = vsel %vm490, %v492, %v488
    %v494 = vmul.f32 1.0, %v493
    %497 = vrot.lane.b32.xlu0 %v436, 4
    %v498 = vpop.permute.xlu0 %497
    %499 = vrot.lane.b32.xlu0 %v439, 4
    %v500 = vpop.permute.xlu0 %499
    %v503 = vadd.f32 %v227, %v498
    %v504 = vadd.f32 %v230, %v500
    %v505 = vxor.u32 %v503, 2147483648
    %v506 = vxor.u32 %v504, 2147483648
    %v507 = vmul.f32 %v505, 1.442695
    %v508 = vpow.pop %v507
    %v509 = vmul.f32 %v506, 1.442695
    %v510 = vpow.pop %v509
    %v511 = vadd.f32 %v508, 1.0
    %v512 = vadd.f32 %v510, 1.0
    %v513 = vrcp.pop %v511
    %v514 = vmul.f32 %v511, %v513
    %v515 = vsub.f32 1.0, %v514
    %v516 = vmul.f32 %v513, %v515
    %v517 = vadd.f32 %v513, %v516
    %vm518 = vweird.f32 %v511
    %vm519 = vweird.f32 %v513
    %vm520 = vmor %vm518, %vm519
    %v521 = vsel %vm520, %v513, %v517
    %v522 = vand.u32 2147483647, %v511
    %vm523 = vcmp.eq.f32.partialorder %v522, 8.507059e+37
    %v524 = vand.u32 %v511, 2147483648
    %v525 = vor.u32 1.1754944e-38, %v524
    %v526 = vsel %vm523, %v525, %v521
    %v527 = vmul.f32 1.0, %v526
    %v528 = vrcp.pop %v512
    %v529 = vmul.f32 %v512, %v528
    %v530 = vsub.f32 1.0, %v529
    %v531 = vmul.f32 %v528, %v530
    %v532 = vadd.f32 %v528, %v531
    %vm533 = vweird.f32 %v512
    %vm534 = vweird.f32 %v528
    %vm535 = vmor %vm533, %vm534
    %v536 = vsel %vm535, %v528, %v532
    %v537 = vand.u32 2147483647, %v512
    %vm538 = vcmp.eq.f32.partialorder %v537, 8.507059e+37
    %v539 = vand.u32 %v512, 2147483648
    %v540 = vor.u32 1.1754944e-38, %v539
    %v541 = vsel %vm538, %v540, %v536
    %v542 = vmul.f32 1.0, %v541
    %v543 = vadd.f32 %v442, %v249
    %v544 = vadd.f32 %v445, %v254
    %547 = vrot.lane.b32.xlu0 %v543, 4
    %v548 = vpop.permute.xlu0 %547
    %549 = vrot.lane.b32.xlu0 %v544, 4
    %v550 = vpop.permute.xlu0 %549
    %v553 = vmul.f32 %v479, %v548
    %v554 = vmul.f32 %v494, %v550
    %v555 = vadd.f32 %v233, %v553
    %v556 = vadd.f32 %v236, %v554
    %v557 = vtanh.pop %v555
    %v558 = vtanh.pop %v556
    %v559 = vsub.f32 1.0, %v527
    %v560 = vsub.f32 1.0, %v542
    %v561 = vmul.f32 %v559, %v557
    %v562 = vmul.f32 %v560, %v558
    %565 = vrot.lane.b32.xlu0 %v410, 4
    %v566 = vpop.permute.xlu0 %565
    %567 = vrot.lane.b32.xlu0 %v411, 4
    %v568 = vpop.permute.xlu0 %567
    %v571 = vmul.f32 %v527, %v566
    %v572 = vmul.f32 %v542, %v568
    %v573 = vadd.f32 %v561, %v571
    %v574 = vadd.f32 %v562, %v572
    %vm575 = vcmp.gt.s32.totalorder %v39, 1
    %v576 = vsel %vm575, 1, 0
    %v577 = vperm.slane %v576, 0
    %vm578 = vcmp.eq.s32.totalorder %v577, 1
    %581 = vrot.lane.b32.xlu0 %v573, 124
    %v582 = vpop.permute.xlu0 %581
    %583 = vrot.lane.b32.xlu0 %v574, 124
    %v584 = vpop.permute.xlu0 %583
    %v587 = vsel %vm578, %v582, %v410
    %v588 = vsel %vm578, %v584, %v411
    %589 = vmatpush.msra.mxu0 0.0
    %590 = vmatpush.msra.mxu0 0.0
    %591 = vmatpush.msra.mxu0 0.0
    %592 = vmatpush.msra.mxu0 0.0
    %593 = vmatpush.msra.mxu0 0.0
    %594 = vmatpush.msra.mxu0 0.0
    %595 = vmatpush.msra.mxu0 0.0
    %596 = vmatpush.msra.mxu0 0.0
    %597 = vmatpush.msra.mxu0 0.0
    %598 = vmatpush.msra.mxu0 0.0
    %599 = vmatpush.msra.mxu0 0.0
    %600 = vmatpush.msra.mxu0 0.0
    %601 = vmatpush.msra.mxu0 0.0
    %602 = vmatpush.msra.mxu0 0.0
    %603 = vmatpush.msra.mxu0 %v588
    %604 = vmatpush.msra.mxu0 %v587
    %605 = vmatmul.f32.gmra.mxu0 %v258
    %v606 = vpop.f32.mrf.mxu0
    %v607 = vadd.f32 0.0, %v606
    %608 = vmatmul.f32.gmra.mxu0 %v261
    %v609 = vpop.f32.mrf.mxu0
    %v610 = vadd.f32 0.0, %v609
    %611 = vmatmul.f32.gmra.mxu0 %v264
    %v612 = vpop.f32.mrf.mxu0
    %v613 = vadd.f32 0.0, %v612
    %614 = vmatmul.f32.gmra.mxu0 %v267
    %v615 = vpop.f32.mrf.mxu0
    %v616 = vadd.f32 0.0, %v615
    %617 = vmatmul.f32.gmra.mxu0 %v270
    %v618 = vpop.f32.mrf.mxu0
    %v619 = vadd.f32 0.0, %v618
    %620 = vmatmul.f32.gmra.mxu0 %v273
    %v621 = vpop.f32.mrf.mxu0
    %v622 = vadd.f32 0.0, %v621
    %623 = vdwg.mxu0
    %626 = vrot.lane.b32.xlu0 %v607, 8
    %v627 = vpop.permute.xlu0 %626
    %628 = vrot.lane.b32.xlu0 %v610, 8
    %v629 = vpop.permute.xlu0 %628
    %v632 = vadd.f32 %v221, %v627
    %v633 = vadd.f32 %v224, %v629
    %v634 = vxor.u32 %v632, 2147483648
    %v635 = vxor.u32 %v633, 2147483648
    %v636 = vmul.f32 %v634, 1.442695
    %v637 = vpow.pop %v636
    %v638 = vmul.f32 %v635, 1.442695
    %v639 = vpow.pop %v638
    %v640 = vadd.f32 %v637, 1.0
    %v641 = vadd.f32 %v639, 1.0
    %v642 = vrcp.pop %v640
    %v643 = vmul.f32 %v640, %v642
    %v644 = vsub.f32 1.0, %v643
    %v645 = vmul.f32 %v642, %v644
    %v646 = vadd.f32 %v642, %v645
    %vm647 = vweird.f32 %v640
    %vm648 = vweird.f32 %v642
    %vm649 = vmor %vm647, %vm648
    %v650 = vsel %vm649, %v642, %v646
    %v651 = vand.u32 2147483647, %v640
    %vm652 = vcmp.eq.f32.partialorder %v651, 8.507059e+37
    %v653 = vand.u32 %v640, 2147483648
    %v654 = vor.u32 1.1754944e-38, %v653
    %v655 = vsel %vm652, %v654, %v650
    %v656 = vmul.f32 1.0, %v655
    %v657 = vrcp.pop %v641
    %v658 = vmul.f32 %v641, %v657
    %v659 = vsub.f32 1.0, %v658
    %v660 = vmul.f32 %v657, %v659
    %v661 = vadd.f32 %v657, %v660
    %vm662 = vweird.f32 %v641
    %vm663 = vweird.f32 %v657
    %vm664 = vmor %vm662, %vm663
    %v665 = vsel %vm664, %v657, %v661
    %v666 = vand.u32 2147483647, %v641
    %vm667 = vcmp.eq.f32.partialorder %v666, 8.507059e+37
    %v668 = vand.u32 %v641, 2147483648
    %v669 = vor.u32 1.1754944e-38, %v668
    %v670 = vsel %vm667, %v669, %v665
    %v671 = vmul.f32 1.0, %v670
    %674 = vrot.lane.b32.xlu0 %v613, 8
    %v675 = vpop.permute.xlu0 %674
    %676 = vrot.lane.b32.xlu0 %v616, 8
    %v677 = vpop.permute.xlu0 %676
    %v680 = vadd.f32 %v227, %v675
    %v681 = vadd.f32 %v230, %v677
    %v682 = vxor.u32 %v680, 2147483648
    %v683 = vxor.u32 %v681, 2147483648
    %v684 = vmul.f32 %v682, 1.442695
    %v685 = vpow.pop %v684
    %v686 = vmul.f32 %v683, 1.442695
    %v687 = vpow.pop %v686
    %v688 = vadd.f32 %v685, 1.0
    %v689 = vadd.f32 %v687, 1.0
    %v690 = vrcp.pop %v688
    %v691 = vmul.f32 %v688, %v690
    %v692 = vsub.f32 1.0, %v691
    %v693 = vmul.f32 %v690, %v692
    %v694 = vadd.f32 %v690, %v693
    %vm695 = vweird.f32 %v688
    %vm696 = vweird.f32 %v690
    %vm697 = vmor %vm695, %vm696
    %v698 = vsel %vm697, %v690, %v694
    %v699 = vand.u32 2147483647, %v688
    %vm700 = vcmp.eq.f32.partialorder %v699, 8.507059e+37
    %v701 = vand.u32 %v688, 2147483648
    %v702 = vor.u32 1.1754944e-38, %v701
    %v703 = vsel %vm700, %v702, %v698
    %v704 = vmul.f32 1.0, %v703
    %v705 = vrcp.pop %v689
    %v706 = vmul.f32 %v689, %v705
    %v707 = vsub.f32 1.0, %v706
    %v708 = vmul.f32 %v705, %v707
    %v709 = vadd.f32 %v705, %v708
    %vm710 = vweird.f32 %v689
    %vm711 = vweird.f32 %v705
    %vm712 = vmor %vm710, %vm711
    %v713 = vsel %vm712, %v705, %v709
    %v714 = vand.u32 2147483647, %v689
    %vm715 = vcmp.eq.f32.partialorder %v714, 8.507059e+37
    %v716 = vand.u32 %v689, 2147483648
    %v717 = vor.u32 1.1754944e-38, %v716
    %v718 = vsel %vm715, %v717, %v713
    %v719 = vmul.f32 1.0, %v718
    %v720 = vadd.f32 %v619, %v249
    %v721 = vadd.f32 %v622, %v254
    %724 = vrot.lane.b32.xlu0 %v720, 8
    %v725 = vpop.permute.xlu0 %724
    %726 = vrot.lane.b32.xlu0 %v721, 8
    %v727 = vpop.permute.xlu0 %726
    %v730 = vmul.f32 %v656, %v725
    %v731 = vmul.f32 %v671, %v727
    %v732 = vadd.f32 %v233, %v730
    %v733 = vadd.f32 %v236, %v731
    %v734 = vtanh.pop %v732
    %v735 = vtanh.pop %v733
    %v736 = vsub.f32 1.0, %v704
    %v737 = vsub.f32 1.0, %v719
    %v738 = vmul.f32 %v736, %v734
    %v739 = vmul.f32 %v737, %v735
    %742 = vrot.lane.b32.xlu0 %v587, 8
    %v743 = vpop.permute.xlu0 %742
    %744 = vrot.lane.b32.xlu0 %v588, 8
    %v745 = vpop.permute.xlu0 %744
    %v748 = vmul.f32 %v704, %v743
    %v749 = vmul.f32 %v719, %v745
    %v750 = vadd.f32 %v738, %v748
    %v751 = vadd.f32 %v739, %v749
    %vm752 = vcmp.gt.s32.totalorder %v39, 2
    %v753 = vsel %vm752, 1, 0
    %v754 = vperm.slane %v753, 0
    %vm755 = vcmp.eq.s32.totalorder %v754, 1
    %758 = vrot.lane.b32.xlu0 %v750, 120
    %v759 = vpop.permute.xlu0 %758
    %760 = vrot.lane.b32.xlu0 %v751, 120
    %v761 = vpop.permute.xlu0 %760
    %v764 = vsel %vm755, %v759, %v587
    %v765 = vsel %vm755, %v761, %v588
    %766 = vmatpush.msra.mxu0 0.0
    %767 = vmatpush.msra.mxu0 0.0
    %768 = vmatpush.msra.mxu0 0.0
    %769 = vmatpush.msra.mxu0 0.0
    %770 = vmatpush.msra.mxu0 0.0
    %771 = vmatpush.msra.mxu0 0.0
    %772 = vmatpush.msra.mxu0 0.0
    %773 = vmatpush.msra.mxu0 0.0
    %774 = vmatpush.msra.mxu0 0.0
    %775 = vmatpush.msra.mxu0 0.0
    %776 = vmatpush.msra.mxu0 0.0
    %777 = vmatpush.msra.mxu0 0.0
    %778 = vmatpush.msra.mxu0 0.0
    %779 = vmatpush.msra.mxu0 0.0
    %780 = vmatpush.msra.mxu0 %v765
    %781 = vmatpush.msra.mxu0 %v764
    %782 = vmatmul.f32.gmra.mxu0 %v258
    %v783 = vpop.f32.mrf.mxu0
    %v784 = vadd.f32 0.0, %v783
    %785 = vmatmul.f32.gmra.mxu0 %v261
    %v786 = vpop.f32.mrf.mxu0
    %v787 = vadd.f32 0.0, %v786
    %788 = vmatmul.f32.gmra.mxu0 %v264
    %v789 = vpop.f32.mrf.mxu0
    %v790 = vadd.f32 0.0, %v789
    %791 = vmatmul.f32.gmra.mxu0 %v267
    %v792 = vpop.f32.mrf.mxu0
    %v793 = vadd.f32 0.0, %v792
    %794 = vmatmul.f32.gmra.mxu0 %v270
    %v795 = vpop.f32.mrf.mxu0
    %v796 = vadd.f32 0.0, %v795
    %797 = vmatmul.f32.gmra.mxu0 %v273
    %v798 = vpop.f32.mrf.mxu0
    %v799 = vadd.f32 0.0, %v798
    %800 = vdwg.mxu0
    %803 = vrot.lane.b32.xlu0 %v784, 12
    %v804 = vpop.permute.xlu0 %803
    %805 = vrot.lane.b32.xlu0 %v787, 12
    %v806 = vpop.permute.xlu0 %805
    %v809 = vadd.f32 %v221, %v804
    %v810 = vadd.f32 %v224, %v806
    %v811 = vxor.u32 %v809, 2147483648
    %v812 = vxor.u32 %v810, 2147483648
    %v813 = vmul.f32 %v811, 1.442695
    %v814 = vpow.pop %v813
    %v815 = vmul.f32 %v812, 1.442695
    %v816 = vpow.pop %v815
    %v817 = vadd.f32 %v814, 1.0
    %v818 = vadd.f32 %v816, 1.0
    %v819 = vrcp.pop %v817
    %v820 = vmul.f32 %v817, %v819
    %v821 = vsub.f32 1.0, %v820
    %v822 = vmul.f32 %v819, %v821
    %v823 = vadd.f32 %v819, %v822
    %vm824 = vweird.f32 %v817
    %vm825 = vweird.f32 %v819
    %vm826 = vmor %vm824, %vm825
    %v827 = vsel %vm826, %v819, %v823
    %v828 = vand.u32 2147483647, %v817
    %vm829 = vcmp.eq.f32.partialorder %v828, 8.507059e+37
    %v830 = vand.u32 %v817, 2147483648
    %v831 = vor.u32 1.1754944e-38, %v830
    %v832 = vsel %vm829, %v831, %v827
    %v833 = vmul.f32 1.0, %v832
    %v834 = vrcp.pop %v818
    %v835 = vmul.f32 %v818, %v834
    %v836 = vsub.f32 1.0, %v835
    %v837 = vmul.f32 %v834, %v836
    %v838 = vadd.f32 %v834, %v837
    %vm839 = vweird.f32 %v818
    %vm840 = vweird.f32 %v834
    %vm841 = vmor %vm839, %vm840
    %v842 = vsel %vm841, %v834, %v838
    %v843 = vand.u32 2147483647, %v818
    %vm844 = vcmp.eq.f32.partialorder %v843, 8.507059e+37
    %v845 = vand.u32 %v818, 2147483648
    %v846 = vor.u32 1.1754944e-38, %v845
    %v847 = vsel %vm844, %v846, %v842
    %v848 = vmul.f32 1.0, %v847
    %851 = vrot.lane.b32.xlu0 %v790, 12
    %v852 = vpop.permute.xlu0 %851
    %853 = vrot.lane.b32.xlu0 %v793, 12
    %v854 = vpop.permute.xlu0 %853
    %v857 = vadd.f32 %v227, %v852
    %v858 = vadd.f32 %v230, %v854
    %v859 = vxor.u32 %v857, 2147483648
    %v860 = vxor.u32 %v858, 2147483648
    %v861 = vmul.f32 %v859, 1.442695
    %v862 = vpow.pop %v861
    %v863 = vmul.f32 %v860, 1.442695
    %v864 = vpow.pop %v863
    %v865 = vadd.f32 %v862, 1.0
    %v866 = vadd.f32 %v864, 1.0
    %v867 = vrcp.pop %v865
    %v868 = vmul.f32 %v865, %v867
    %v869 = vsub.f32 1.0, %v868
    %v870 = vmul.f32 %v867, %v869
    %v871 = vadd.f32 %v867, %v870
    %vm872 = vweird.f32 %v865
    %vm873 = vweird.f32 %v867
    %vm874 = vmor %vm872, %vm873
    %v875 = vsel %vm874, %v867, %v871
    %v876 = vand.u32 2147483647, %v865
    %vm877 = vcmp.eq.f32.partialorder %v876, 8.507059e+37
    %v878 = vand.u32 %v865, 2147483648
    %v879 = vor.u32 1.1754944e-38, %v878
    %v880 = vsel %vm877, %v879, %v875
    %v881 = vmul.f32 1.0, %v880
    %v882 = vrcp.pop %v866
    %v883 = vmul.f32 %v866, %v882
    %v884 = vsub.f32 1.0, %v883
    %v885 = vmul.f32 %v882, %v884
    %v886 = vadd.f32 %v882, %v885
    %vm887 = vweird.f32 %v866
    %vm888 = vweird.f32 %v882
    %vm889 = vmor %vm887, %vm888
    %v890 = vsel %vm889, %v882, %v886
    %v891 = vand.u32 2147483647, %v866
    %vm892 = vcmp.eq.f32.partialorder %v891, 8.507059e+37
    %v893 = vand.u32 %v866, 2147483648
    %v894 = vor.u32 1.1754944e-38, %v893
    %v895 = vsel %vm892, %v894, %v890
    %v896 = vmul.f32 1.0, %v895
    %v897 = vadd.f32 %v796, %v249
    %v898 = vadd.f32 %v799, %v254
    %901 = vrot.lane.b32.xlu0 %v897, 12
    %v902 = vpop.permute.xlu0 %901
    %903 = vrot.lane.b32.xlu0 %v898, 12
    %v904 = vpop.permute.xlu0 %903
    %v907 = vmul.f32 %v833, %v902
    %v908 = vmul.f32 %v848, %v904
    %v909 = vadd.f32 %v233, %v907
    %v910 = vadd.f32 %v236, %v908
    %v911 = vtanh.pop %v909
    %v912 = vtanh.pop %v910
    %v913 = vsub.f32 1.0, %v881
    %v914 = vsub.f32 1.0, %v896
    %v915 = vmul.f32 %v913, %v911
    %v916 = vmul.f32 %v914, %v912
    %919 = vrot.lane.b32.xlu0 %v764, 12
    %v920 = vpop.permute.xlu0 %919
    %921 = vrot.lane.b32.xlu0 %v765, 12
    %v922 = vpop.permute.xlu0 %921
    %v925 = vmul.f32 %v881, %v920
    %v926 = vmul.f32 %v896, %v922
    %v927 = vadd.f32 %v915, %v925
    %v928 = vadd.f32 %v916, %v926
    %vm929 = vcmp.gt.s32.totalorder %v39, 3
    %v930 = vsel %vm929, 1, 0
    %v931 = vperm.slane %v930, 0
    %vm932 = vcmp.eq.s32.totalorder %v931, 1
    %935 = vrot.lane.b32.xlu0 %v927, 116
    %v936 = vpop.permute.xlu0 %935
    %937 = vrot.lane.b32.xlu0 %v928, 116
    %v938 = vpop.permute.xlu0 %937
    %v941 = vsel %vm932, %v936, %v764
    %v942 = vsel %vm932, %v938, %v765
    %943 = vmatpush.msra.mxu0 0.0
    %944 = vmatpush.msra.mxu0 0.0
    %945 = vmatpush.msra.mxu0 0.0
    %946 = vmatpush.msra.mxu0 0.0
    %947 = vmatpush.msra.mxu0 0.0
    %948 = vmatpush.msra.mxu0 0.0
    %949 = vmatpush.msra.mxu0 0.0
    %950 = vmatpush.msra.mxu0 0.0
    %951 = vmatpush.msra.mxu0 0.0
    %952 = vmatpush.msra.mxu0 0.0
    %953 = vmatpush.msra.mxu0 0.0
    %954 = vmatpush.msra.mxu0 0.0
    %955 = vmatpush.msra.mxu0 0.0
    %956 = vmatpush.msra.mxu0 0.0
    %957 = vmatpush.msra.mxu0 %v942
    %958 = vmatpush.msra.mxu0 %v941
    %959 = vmatmul.f32.gmra.mxu0 %v258
    %v960 = vpop.f32.mrf.mxu0
    %v961 = vadd.f32 0.0, %v960
    %962 = vmatmul.f32.gmra.mxu0 %v261
    %v963 = vpop.f32.mrf.mxu0
    %v964 = vadd.f32 0.0, %v963
    %965 = vmatmul.f32.gmra.mxu0 %v264
    %v966 = vpop.f32.mrf.mxu0
    %v967 = vadd.f32 0.0, %v966
    %968 = vmatmul.f32.gmra.mxu0 %v267
    %v969 = vpop.f32.mrf.mxu0
    %v970 = vadd.f32 0.0, %v969
    %971 = vmatmul.f32.gmra.mxu0 %v270
    %v972 = vpop.f32.mrf.mxu0
    %v973 = vadd.f32 0.0, %v972
    %974 = vmatmul.f32.gmra.mxu0 %v273
    %v975 = vpop.f32.mrf.mxu0
    %v976 = vadd.f32 0.0, %v975
    %977 = vdwg.mxu0
    %980 = vrot.lane.b32.xlu0 %v961, 16
    %v981 = vpop.permute.xlu0 %980
    %982 = vrot.lane.b32.xlu0 %v964, 16
    %v983 = vpop.permute.xlu0 %982
    %v986 = vadd.f32 %v221, %v981
    %v987 = vadd.f32 %v224, %v983
    %v988 = vxor.u32 %v986, 2147483648
    %v989 = vxor.u32 %v987, 2147483648
    %v990 = vmul.f32 %v988, 1.442695
    %v991 = vpow.pop %v990
    %v992 = vmul.f32 %v989, 1.442695
    %v993 = vpow.pop %v992
    %v994 = vadd.f32 %v991, 1.0
    %v995 = vadd.f32 %v993, 1.0
    %v996 = vrcp.pop %v994
    %v997 = vmul.f32 %v994, %v996
    %v998 = vsub.f32 1.0, %v997
    %v999 = vmul.f32 %v996, %v998
    %v1000 = vadd.f32 %v996, %v999
    %vm1001 = vweird.f32 %v994
    %vm1002 = vweird.f32 %v996
    %vm1003 = vmor %vm1001, %vm1002
    %v1004 = vsel %vm1003, %v996, %v1000
    %v1005 = vand.u32 2147483647, %v994
    %vm1006 = vcmp.eq.f32.partialorder %v1005, 8.507059e+37
    %v1007 = vand.u32 %v994, 2147483648
    %v1008 = vor.u32 1.1754944e-38, %v1007
    %v1009 = vsel %vm1006, %v1008, %v1004
    %v1010 = vmul.f32 1.0, %v1009
    %v1011 = vrcp.pop %v995
    %v1012 = vmul.f32 %v995, %v1011
    %v1013 = vsub.f32 1.0, %v1012
    %v1014 = vmul.f32 %v1011, %v1013
    %v1015 = vadd.f32 %v1011, %v1014
    %vm1016 = vweird.f32 %v995
    %vm1017 = vweird.f32 %v1011
    %vm1018 = vmor %vm1016, %vm1017
    %v1019 = vsel %vm1018, %v1011, %v1015
    %v1020 = vand.u32 2147483647, %v995
    %vm1021 = vcmp.eq.f32.partialorder %v1020, 8.507059e+37
    %v1022 = vand.u32 %v995, 2147483648
    %v1023 = vor.u32 1.1754944e-38, %v1022
    %v1024 = vsel %vm1021, %v1023, %v1019
    %v1025 = vmul.f32 1.0, %v1024
    %1028 = vrot.lane.b32.xlu0 %v967, 16
    %v1029 = vpop.permute.xlu0 %1028
    %1030 = vrot.lane.b32.xlu0 %v970, 16
    %v1031 = vpop.permute.xlu0 %1030
    %v1034 = vadd.f32 %v227, %v1029
    %v1035 = vadd.f32 %v230, %v1031
    %v1036 = vxor.u32 %v1034, 2147483648
    %v1037 = vxor.u32 %v1035, 2147483648
    %v1038 = vmul.f32 %v1036, 1.442695
    %v1039 = vpow.pop %v1038
    %v1040 = vmul.f32 %v1037, 1.442695
    %v1041 = vpow.pop %v1040
    %v1042 = vadd.f32 %v1039, 1.0
    %v1043 = vadd.f32 %v1041, 1.0
    %v1044 = vrcp.pop %v1042
    %v1045 = vmul.f32 %v1042, %v1044
    %v1046 = vsub.f32 1.0, %v1045
    %v1047 = vmul.f32 %v1044, %v1046
    %v1048 = vadd.f32 %v1044, %v1047
    %vm1049 = vweird.f32 %v1042
    %vm1050 = vweird.f32 %v1044
    %vm1051 = vmor %vm1049, %vm1050
    %v1052 = vsel %vm1051, %v1044, %v1048
    %v1053 = vand.u32 2147483647, %v1042
    %vm1054 = vcmp.eq.f32.partialorder %v1053, 8.507059e+37
    %v1055 = vand.u32 %v1042, 2147483648
    %v1056 = vor.u32 1.1754944e-38, %v1055
    %v1057 = vsel %vm1054, %v1056, %v1052
    %v1058 = vmul.f32 1.0, %v1057
    %v1059 = vrcp.pop %v1043
    %v1060 = vmul.f32 %v1043, %v1059
    %v1061 = vsub.f32 1.0, %v1060
    %v1062 = vmul.f32 %v1059, %v1061
    %v1063 = vadd.f32 %v1059, %v1062
    %vm1064 = vweird.f32 %v1043
    %vm1065 = vweird.f32 %v1059
    %vm1066 = vmor %vm1064, %vm1065
    %v1067 = vsel %vm1066, %v1059, %v1063
    %v1068 = vand.u32 2147483647, %v1043
    %vm1069 = vcmp.eq.f32.partialorder %v1068, 8.507059e+37
    %v1070 = vand.u32 %v1043, 2147483648
    %v1071 = vor.u32 1.1754944e-38, %v1070
    %v1072 = vsel %vm1069, %v1071, %v1067
    %v1073 = vmul.f32 1.0, %v1072
    %v1074 = vadd.f32 %v973, %v249
    %v1075 = vadd.f32 %v976, %v254
    %1078 = vrot.lane.b32.xlu0 %v1074, 16
    %v1079 = vpop.permute.xlu0 %1078
    %1080 = vrot.lane.b32.xlu0 %v1075, 16
    %v1081 = vpop.permute.xlu0 %1080
    %v1084 = vmul.f32 %v1010, %v1079
    %v1085 = vmul.f32 %v1025, %v1081
    %v1086 = vadd.f32 %v233, %v1084
    %v1087 = vadd.f32 %v236, %v1085
    %v1088 = vtanh.pop %v1086
    %v1089 = vtanh.pop %v1087
    %v1090 = vsub.f32 1.0, %v1058
    %v1091 = vsub.f32 1.0, %v1073
    %v1092 = vmul.f32 %v1090, %v1088
    %v1093 = vmul.f32 %v1091, %v1089
    %1096 = vrot.lane.b32.xlu0 %v941, 16
    %v1097 = vpop.permute.xlu0 %1096
    %1098 = vrot.lane.b32.xlu0 %v942, 16
    %v1099 = vpop.permute.xlu0 %1098
    %v1102 = vmul.f32 %v1058, %v1097
    %v1103 = vmul.f32 %v1073, %v1099
    %v1104 = vadd.f32 %v1092, %v1102
    %v1105 = vadd.f32 %v1093, %v1103
    %vm1106 = vcmp.gt.s32.totalorder %v39, 4
    %v1107 = vsel %vm1106, 1, 0
    %v1108 = vperm.slane %v1107, 0
    %vm1109 = vcmp.eq.s32.totalorder %v1108, 1
    %1112 = vrot.lane.b32.xlu0 %v1104, 112
    %v1113 = vpop.permute.xlu0 %1112
    %1114 = vrot.lane.b32.xlu0 %v1105, 112
    %v1115 = vpop.permute.xlu0 %1114
    %v1118 = vsel %vm1109, %v1113, %v941
    %v1119 = vsel %vm1109, %v1115, %v942
    %1120 = vmatpush.msra.mxu0 0.0
    %1121 = vmatpush.msra.mxu0 0.0
    %1122 = vmatpush.msra.mxu0 0.0
    %1123 = vmatpush.msra.mxu0 0.0
    %1124 = vmatpush.msra.mxu0 0.0
    %1125 = vmatpush.msra.mxu0 0.0
    %1126 = vmatpush.msra.mxu0 0.0
    %1127 = vmatpush.msra.mxu0 0.0
    %1128 = vmatpush.msra.mxu0 0.0
    %1129 = vmatpush.msra.mxu0 0.0
    %1130 = vmatpush.msra.mxu0 0.0
    %1131 = vmatpush.msra.mxu0 0.0
    %1132 = vmatpush.msra.mxu0 0.0
    %1133 = vmatpush.msra.mxu0 0.0
    %1134 = vmatpush.msra.mxu0 %v1119
    %1135 = vmatpush.msra.mxu0 %v1118
    %1136 = vmatmul.f32.gmra.mxu0 %v258
    %v1137 = vpop.f32.mrf.mxu0
    %v1138 = vadd.f32 0.0, %v1137
    %1139 = vmatmul.f32.gmra.mxu0 %v261
    %v1140 = vpop.f32.mrf.mxu0
    %v1141 = vadd.f32 0.0, %v1140
    %1142 = vmatmul.f32.gmra.mxu0 %v264
    %v1143 = vpop.f32.mrf.mxu0
    %v1144 = vadd.f32 0.0, %v1143
    %1145 = vmatmul.f32.gmra.mxu0 %v267
    %v1146 = vpop.f32.mrf.mxu0
    %v1147 = vadd.f32 0.0, %v1146
    %1148 = vmatmul.f32.gmra.mxu0 %v270
    %v1149 = vpop.f32.mrf.mxu0
    %v1150 = vadd.f32 0.0, %v1149
    %1151 = vmatmul.f32.gmra.mxu0 %v273
    %v1152 = vpop.f32.mrf.mxu0
    %v1153 = vadd.f32 0.0, %v1152
    %1154 = vdwg.mxu0
    %1157 = vrot.lane.b32.xlu0 %v1138, 20
    %v1158 = vpop.permute.xlu0 %1157
    %1159 = vrot.lane.b32.xlu0 %v1141, 20
    %v1160 = vpop.permute.xlu0 %1159
    %v1163 = vadd.f32 %v221, %v1158
    %v1164 = vadd.f32 %v224, %v1160
    %v1165 = vxor.u32 %v1163, 2147483648
    %v1166 = vxor.u32 %v1164, 2147483648
    %v1167 = vmul.f32 %v1165, 1.442695
    %v1168 = vpow.pop %v1167
    %v1169 = vmul.f32 %v1166, 1.442695
    %v1170 = vpow.pop %v1169
    %v1171 = vadd.f32 %v1168, 1.0
    %v1172 = vadd.f32 %v1170, 1.0
    %v1173 = vrcp.pop %v1171
    %v1174 = vmul.f32 %v1171, %v1173
    %v1175 = vsub.f32 1.0, %v1174
    %v1176 = vmul.f32 %v1173, %v1175
    %v1177 = vadd.f32 %v1173, %v1176
    %vm1178 = vweird.f32 %v1171
    %vm1179 = vweird.f32 %v1173
    %vm1180 = vmor %vm1178, %vm1179
    %v1181 = vsel %vm1180, %v1173, %v1177
    %v1182 = vand.u32 2147483647, %v1171
    %vm1183 = vcmp.eq.f32.partialorder %v1182, 8.507059e+37
    %v1184 = vand.u32 %v1171, 2147483648
    %v1185 = vor.u32 1.1754944e-38, %v1184
    %v1186 = vsel %vm1183, %v1185, %v1181
    %v1187 = vmul.f32 1.0, %v1186
    %v1188 = vrcp.pop %v1172
    %v1189 = vmul.f32 %v1172, %v1188
    %v1190 = vsub.f32 1.0, %v1189
    %v1191 = vmul.f32 %v1188, %v1190
    %v1192 = vadd.f32 %v1188, %v1191
    %vm1193 = vweird.f32 %v1172
    %vm1194 = vweird.f32 %v1188
    %vm1195 = vmor %vm1193, %vm1194
    %v1196 = vsel %vm1195, %v1188, %v1192
    %v1197 = vand.u32 2147483647, %v1172
    %vm1198 = vcmp.eq.f32.partialorder %v1197, 8.507059e+37
    %v1199 = vand.u32 %v1172, 2147483648
    %v1200 = vor.u32 1.1754944e-38, %v1199
    %v1201 = vsel %vm1198, %v1200, %v1196
    %v1202 = vmul.f32 1.0, %v1201
    %1205 = vrot.lane.b32.xlu0 %v1144, 20
    %v1206 = vpop.permute.xlu0 %1205
    %1207 = vrot.lane.b32.xlu0 %v1147, 20
    %v1208 = vpop.permute.xlu0 %1207
    %v1211 = vadd.f32 %v227, %v1206
    %v1212 = vadd.f32 %v230, %v1208
    %v1213 = vxor.u32 %v1211, 2147483648
    %v1214 = vxor.u32 %v1212, 2147483648
    %v1215 = vmul.f32 %v1213, 1.442695
    %v1216 = vpow.pop %v1215
    %v1217 = vmul.f32 %v1214, 1.442695
    %v1218 = vpow.pop %v1217
    %v1219 = vadd.f32 %v1216, 1.0
    %v1220 = vadd.f32 %v1218, 1.0
    %v1221 = vrcp.pop %v1219
    %v1222 = vmul.f32 %v1219, %v1221
    %v1223 = vsub.f32 1.0, %v1222
    %v1224 = vmul.f32 %v1221, %v1223
    %v1225 = vadd.f32 %v1221, %v1224
    %vm1226 = vweird.f32 %v1219
    %vm1227 = vweird.f32 %v1221
    %vm1228 = vmor %vm1226, %vm1227
    %v1229 = vsel %vm1228, %v1221, %v1225
    %v1230 = vand.u32 2147483647, %v1219
    %vm1231 = vcmp.eq.f32.partialorder %v1230, 8.507059e+37
    %v1232 = vand.u32 %v1219, 2147483648
    %v1233 = vor.u32 1.1754944e-38, %v1232
    %v1234 = vsel %vm1231, %v1233, %v1229
    %v1235 = vmul.f32 1.0, %v1234
    %v1236 = vrcp.pop %v1220
    %v1237 = vmul.f32 %v1220, %v1236
    %v1238 = vsub.f32 1.0, %v1237
    %v1239 = vmul.f32 %v1236, %v1238
    %v1240 = vadd.f32 %v1236, %v1239
    %vm1241 = vweird.f32 %v1220
    %vm1242 = vweird.f32 %v1236
    %vm1243 = vmor %vm1241, %vm1242
    %v1244 = vsel %vm1243, %v1236, %v1240
    %v1245 = vand.u32 2147483647, %v1220
    %vm1246 = vcmp.eq.f32.partialorder %v1245, 8.507059e+37
    %v1247 = vand.u32 %v1220, 2147483648
    %v1248 = vor.u32 1.1754944e-38, %v1247
    %v1249 = vsel %vm1246, %v1248, %v1244
    %v1250 = vmul.f32 1.0, %v1249
    %v1251 = vadd.f32 %v1150, %v249
    %v1252 = vadd.f32 %v1153, %v254
    %1255 = vrot.lane.b32.xlu0 %v1251, 20
    %v1256 = vpop.permute.xlu0 %1255
    %1257 = vrot.lane.b32.xlu0 %v1252, 20
    %v1258 = vpop.permute.xlu0 %1257
    %v1261 = vmul.f32 %v1187, %v1256
    %v1262 = vmul.f32 %v1202, %v1258
    %v1263 = vadd.f32 %v233, %v1261
    %v1264 = vadd.f32 %v236, %v1262
    %v1265 = vtanh.pop %v1263
    %v1266 = vtanh.pop %v1264
    %v1267 = vsub.f32 1.0, %v1235
    %v1268 = vsub.f32 1.0, %v1250
    %v1269 = vmul.f32 %v1267, %v1265
    %v1270 = vmul.f32 %v1268, %v1266
    %1273 = vrot.lane.b32.xlu0 %v1118, 20
    %v1274 = vpop.permute.xlu0 %1273
    %1275 = vrot.lane.b32.xlu0 %v1119, 20
    %v1276 = vpop.permute.xlu0 %1275
    %v1279 = vmul.f32 %v1235, %v1274
    %v1280 = vmul.f32 %v1250, %v1276
    %v1281 = vadd.f32 %v1269, %v1279
    %v1282 = vadd.f32 %v1270, %v1280
    %vm1283 = vcmp.gt.s32.totalorder %v39, 5
    %v1284 = vsel %vm1283, 1, 0
    %v1285 = vperm.slane %v1284, 0
    %vm1286 = vcmp.eq.s32.totalorder %v1285, 1
    %1289 = vrot.lane.b32.xlu0 %v1281, 108
    %v1290 = vpop.permute.xlu0 %1289
    %1291 = vrot.lane.b32.xlu0 %v1282, 108
    %v1292 = vpop.permute.xlu0 %1291
    %v1295 = vsel %vm1286, %v1290, %v1118
    %v1296 = vsel %vm1286, %v1292, %v1119
    %1297 = vmatpush.msra.mxu0 0.0
    %1298 = vmatpush.msra.mxu0 0.0
    %1299 = vmatpush.msra.mxu0 0.0
    %1300 = vmatpush.msra.mxu0 0.0
    %1301 = vmatpush.msra.mxu0 0.0
    %1302 = vmatpush.msra.mxu0 0.0
    %1303 = vmatpush.msra.mxu0 0.0
    %1304 = vmatpush.msra.mxu0 0.0
    %1305 = vmatpush.msra.mxu0 0.0
    %1306 = vmatpush.msra.mxu0 0.0
    %1307 = vmatpush.msra.mxu0 0.0
    %1308 = vmatpush.msra.mxu0 0.0
    %1309 = vmatpush.msra.mxu0 0.0
    %1310 = vmatpush.msra.mxu0 0.0
    %1311 = vmatpush.msra.mxu0 %v1296
    %1312 = vmatpush.msra.mxu0 %v1295
    %1313 = vmatmul.f32.gmra.mxu0 %v258
    %v1314 = vpop.f32.mrf.mxu0
    %v1315 = vadd.f32 0.0, %v1314
    %1316 = vmatmul.f32.gmra.mxu0 %v261
    %v1317 = vpop.f32.mrf.mxu0
    %v1318 = vadd.f32 0.0, %v1317
    %1319 = vmatmul.f32.gmra.mxu0 %v264
    %v1320 = vpop.f32.mrf.mxu0
    %v1321 = vadd.f32 0.0, %v1320
    %1322 = vmatmul.f32.gmra.mxu0 %v267
    %v1323 = vpop.f32.mrf.mxu0
    %v1324 = vadd.f32 0.0, %v1323
    %1325 = vmatmul.f32.gmra.mxu0 %v270
    %v1326 = vpop.f32.mrf.mxu0
    %v1327 = vadd.f32 0.0, %v1326
    %1328 = vmatmul.f32.gmra.mxu0 %v273
    %v1329 = vpop.f32.mrf.mxu0
    %v1330 = vadd.f32 0.0, %v1329
    %1331 = vdwg.mxu0
    %1334 = vrot.lane.b32.xlu0 %v1315, 24
    %v1335 = vpop.permute.xlu0 %1334
    %1336 = vrot.lane.b32.xlu0 %v1318, 24
    %v1337 = vpop.permute.xlu0 %1336
    %v1340 = vadd.f32 %v221, %v1335
    %v1341 = vadd.f32 %v224, %v1337
    %v1342 = vxor.u32 %v1340, 2147483648
    %v1343 = vxor.u32 %v1341, 2147483648
    %v1344 = vmul.f32 %v1342, 1.442695
    %v1345 = vpow.pop %v1344
    %v1346 = vmul.f32 %v1343, 1.442695
    %v1347 = vpow.pop %v1346
    %v1348 = vadd.f32 %v1345, 1.0
    %v1349 = vadd.f32 %v1347, 1.0
    %v1350 = vrcp.pop %v1348
    %v1351 = vmul.f32 %v1348, %v1350
    %v1352 = vsub.f32 1.0, %v1351
    %v1353 = vmul.f32 %v1350, %v1352
    %v1354 = vadd.f32 %v1350, %v1353
    %vm1355 = vweird.f32 %v1348
    %vm1356 = vweird.f32 %v1350
    %vm1357 = vmor %vm1355, %vm1356
    %v1358 = vsel %vm1357, %v1350, %v1354
    %v1359 = vand.u32 2147483647, %v1348
    %vm1360 = vcmp.eq.f32.partialorder %v1359, 8.507059e+37
    %v1361 = vand.u32 %v1348, 2147483648
    %v1362 = vor.u32 1.1754944e-38, %v1361
    %v1363 = vsel %vm1360, %v1362, %v1358
    %v1364 = vmul.f32 1.0, %v1363
    %v1365 = vrcp.pop %v1349
    %v1366 = vmul.f32 %v1349, %v1365
    %v1367 = vsub.f32 1.0, %v1366
    %v1368 = vmul.f32 %v1365, %v1367
    %v1369 = vadd.f32 %v1365, %v1368
    %vm1370 = vweird.f32 %v1349
    %vm1371 = vweird.f32 %v1365
    %vm1372 = vmor %vm1370, %vm1371
    %v1373 = vsel %vm1372, %v1365, %v1369
    %v1374 = vand.u32 2147483647, %v1349
    %vm1375 = vcmp.eq.f32.partialorder %v1374, 8.507059e+37
    %v1376 = vand.u32 %v1349, 2147483648
    %v1377 = vor.u32 1.1754944e-38, %v1376
    %v1378 = vsel %vm1375, %v1377, %v1373
    %v1379 = vmul.f32 1.0, %v1378
    %1382 = vrot.lane.b32.xlu0 %v1321, 24
    %v1383 = vpop.permute.xlu0 %1382
    %1384 = vrot.lane.b32.xlu0 %v1324, 24
    %v1385 = vpop.permute.xlu0 %1384
    %v1388 = vadd.f32 %v227, %v1383
    %v1389 = vadd.f32 %v230, %v1385
    %v1390 = vxor.u32 %v1388, 2147483648
    %v1391 = vxor.u32 %v1389, 2147483648
    %v1392 = vmul.f32 %v1390, 1.442695
    %v1393 = vpow.pop %v1392
    %v1394 = vmul.f32 %v1391, 1.442695
    %v1395 = vpow.pop %v1394
    %v1396 = vadd.f32 %v1393, 1.0
    %v1397 = vadd.f32 %v1395, 1.0
    %v1398 = vrcp.pop %v1396
    %v1399 = vmul.f32 %v1396, %v1398
    %v1400 = vsub.f32 1.0, %v1399
    %v1401 = vmul.f32 %v1398, %v1400
    %v1402 = vadd.f32 %v1398, %v1401
    %vm1403 = vweird.f32 %v1396
    %vm1404 = vweird.f32 %v1398
    %vm1405 = vmor %vm1403, %vm1404
    %v1406 = vsel %vm1405, %v1398, %v1402
    %v1407 = vand.u32 2147483647, %v1396
    %vm1408 = vcmp.eq.f32.partialorder %v1407, 8.507059e+37
    %v1409 = vand.u32 %v1396, 2147483648
    %v1410 = vor.u32 1.1754944e-38, %v1409
    %v1411 = vsel %vm1408, %v1410, %v1406
    %v1412 = vmul.f32 1.0, %v1411
    %v1413 = vrcp.pop %v1397
    %v1414 = vmul.f32 %v1397, %v1413
    %v1415 = vsub.f32 1.0, %v1414
    %v1416 = vmul.f32 %v1413, %v1415
    %v1417 = vadd.f32 %v1413, %v1416
    %vm1418 = vweird.f32 %v1397
    %vm1419 = vweird.f32 %v1413
    %vm1420 = vmor %vm1418, %vm1419
    %v1421 = vsel %vm1420, %v1413, %v1417
    %v1422 = vand.u32 2147483647, %v1397
    %vm1423 = vcmp.eq.f32.partialorder %v1422, 8.507059e+37
    %v1424 = vand.u32 %v1397, 2147483648
    %v1425 = vor.u32 1.1754944e-38, %v1424
    %v1426 = vsel %vm1423, %v1425, %v1421
    %v1427 = vmul.f32 1.0, %v1426
    %v1428 = vadd.f32 %v1327, %v249
    %v1429 = vadd.f32 %v1330, %v254
    %1432 = vrot.lane.b32.xlu0 %v1428, 24
    %v1433 = vpop.permute.xlu0 %1432
    %1434 = vrot.lane.b32.xlu0 %v1429, 24
    %v1435 = vpop.permute.xlu0 %1434
    %v1438 = vmul.f32 %v1364, %v1433
    %v1439 = vmul.f32 %v1379, %v1435
    %v1440 = vadd.f32 %v233, %v1438
    %v1441 = vadd.f32 %v236, %v1439
    %v1442 = vtanh.pop %v1440
    %v1443 = vtanh.pop %v1441
    %v1444 = vsub.f32 1.0, %v1412
    %v1445 = vsub.f32 1.0, %v1427
    %v1446 = vmul.f32 %v1444, %v1442
    %v1447 = vmul.f32 %v1445, %v1443
    %1450 = vrot.lane.b32.xlu0 %v1295, 24
    %v1451 = vpop.permute.xlu0 %1450
    %1452 = vrot.lane.b32.xlu0 %v1296, 24
    %v1453 = vpop.permute.xlu0 %1452
    %v1456 = vmul.f32 %v1412, %v1451
    %v1457 = vmul.f32 %v1427, %v1453
    %v1458 = vadd.f32 %v1446, %v1456
    %v1459 = vadd.f32 %v1447, %v1457
    %vm1460 = vcmp.gt.s32.totalorder %v39, 6
    %v1461 = vsel %vm1460, 1, 0
    %v1462 = vperm.slane %v1461, 0
    %vm1463 = vcmp.eq.s32.totalorder %v1462, 1
    %1466 = vrot.lane.b32.xlu0 %v1458, 104
    %v1467 = vpop.permute.xlu0 %1466
    %1468 = vrot.lane.b32.xlu0 %v1459, 104
    %v1469 = vpop.permute.xlu0 %1468
    %v1472 = vsel %vm1463, %v1467, %v1295
    %v1473 = vsel %vm1463, %v1469, %v1296
    %1474 = vmatpush.msra.mxu0 0.0
    %1475 = vmatpush.msra.mxu0 0.0
    %1476 = vmatpush.msra.mxu0 0.0
    %1477 = vmatpush.msra.mxu0 0.0
    %1478 = vmatpush.msra.mxu0 0.0
    %1479 = vmatpush.msra.mxu0 0.0
    %1480 = vmatpush.msra.mxu0 0.0
    %1481 = vmatpush.msra.mxu0 0.0
    %1482 = vmatpush.msra.mxu0 0.0
    %1483 = vmatpush.msra.mxu0 0.0
    %1484 = vmatpush.msra.mxu0 0.0
    %1485 = vmatpush.msra.mxu0 0.0
    %1486 = vmatpush.msra.mxu0 0.0
    %1487 = vmatpush.msra.mxu0 0.0
    %1488 = vmatpush.msra.mxu0 %v1473
    %1489 = vmatpush.msra.mxu0 %v1472
    %1490 = vmatmul.f32.gmra.mxu0 %v258
    %v1491 = vpop.f32.mrf.mxu0
    %v1492 = vadd.f32 0.0, %v1491
    %1493 = vmatmul.f32.gmra.mxu0 %v261
    %v1494 = vpop.f32.mrf.mxu0
    %v1495 = vadd.f32 0.0, %v1494
    %1496 = vmatmul.f32.gmra.mxu0 %v264
    %v1497 = vpop.f32.mrf.mxu0
    %v1498 = vadd.f32 0.0, %v1497
    %1499 = vmatmul.f32.gmra.mxu0 %v267
    %v1500 = vpop.f32.mrf.mxu0
    %v1501 = vadd.f32 0.0, %v1500
    %1502 = vmatmul.f32.gmra.mxu0 %v270
    %v1503 = vpop.f32.mrf.mxu0
    %v1504 = vadd.f32 0.0, %v1503
    %1505 = vmatmul.f32.gmra.mxu0 %v273
    %v1506 = vpop.f32.mrf.mxu0
    %v1507 = vadd.f32 0.0, %v1506
    %1508 = vdwg.mxu0
    %1511 = vrot.lane.b32.xlu0 %v1492, 28
    %v1512 = vpop.permute.xlu0 %1511
    %1513 = vrot.lane.b32.xlu0 %v1495, 28
    %v1514 = vpop.permute.xlu0 %1513
    %v1517 = vadd.f32 %v221, %v1512
    %v1518 = vadd.f32 %v224, %v1514
    %v1519 = vxor.u32 %v1517, 2147483648
    %v1520 = vxor.u32 %v1518, 2147483648
    %v1521 = vmul.f32 %v1519, 1.442695
    %v1522 = vpow.pop %v1521
    %v1523 = vmul.f32 %v1520, 1.442695
    %v1524 = vpow.pop %v1523
    %v1525 = vadd.f32 %v1522, 1.0
    %v1526 = vadd.f32 %v1524, 1.0
    %v1527 = vrcp.pop %v1525
    %v1528 = vmul.f32 %v1525, %v1527
    %v1529 = vsub.f32 1.0, %v1528
    %v1530 = vmul.f32 %v1527, %v1529
    %v1531 = vadd.f32 %v1527, %v1530
    %vm1532 = vweird.f32 %v1525
    %vm1533 = vweird.f32 %v1527
    %vm1534 = vmor %vm1532, %vm1533
    %v1535 = vsel %vm1534, %v1527, %v1531
    %v1536 = vand.u32 2147483647, %v1525
    %vm1537 = vcmp.eq.f32.partialorder %v1536, 8.507059e+37
    %v1538 = vand.u32 %v1525, 2147483648
    %v1539 = vor.u32 1.1754944e-38, %v1538
    %v1540 = vsel %vm1537, %v1539, %v1535
    %v1541 = vmul.f32 1.0, %v1540
    %v1542 = vrcp.pop %v1526
    %v1543 = vmul.f32 %v1526, %v1542
    %v1544 = vsub.f32 1.0, %v1543
    %v1545 = vmul.f32 %v1542, %v1544
    %v1546 = vadd.f32 %v1542, %v1545
    %vm1547 = vweird.f32 %v1526
    %vm1548 = vweird.f32 %v1542
    %vm1549 = vmor %vm1547, %vm1548
    %v1550 = vsel %vm1549, %v1542, %v1546
    %v1551 = vand.u32 2147483647, %v1526
    %vm1552 = vcmp.eq.f32.partialorder %v1551, 8.507059e+37
    %v1553 = vand.u32 %v1526, 2147483648
    %v1554 = vor.u32 1.1754944e-38, %v1553
    %v1555 = vsel %vm1552, %v1554, %v1550
    %v1556 = vmul.f32 1.0, %v1555
    %1559 = vrot.lane.b32.xlu0 %v1498, 28
    %v1560 = vpop.permute.xlu0 %1559
    %1561 = vrot.lane.b32.xlu0 %v1501, 28
    %v1562 = vpop.permute.xlu0 %1561
    %v1565 = vadd.f32 %v227, %v1560
    %v1566 = vadd.f32 %v230, %v1562
    %v1567 = vxor.u32 %v1565, 2147483648
    %v1568 = vxor.u32 %v1566, 2147483648
    %v1569 = vmul.f32 %v1567, 1.442695
    %v1570 = vpow.pop %v1569
    %v1571 = vmul.f32 %v1568, 1.442695
    %v1572 = vpow.pop %v1571
    %v1573 = vadd.f32 %v1570, 1.0
    %v1574 = vadd.f32 %v1572, 1.0
    %v1575 = vrcp.pop %v1573
    %v1576 = vmul.f32 %v1573, %v1575
    %v1577 = vsub.f32 1.0, %v1576
    %v1578 = vmul.f32 %v1575, %v1577
    %v1579 = vadd.f32 %v1575, %v1578
    %vm1580 = vweird.f32 %v1573
    %vm1581 = vweird.f32 %v1575
    %vm1582 = vmor %vm1580, %vm1581
    %v1583 = vsel %vm1582, %v1575, %v1579
    %v1584 = vand.u32 2147483647, %v1573
    %vm1585 = vcmp.eq.f32.partialorder %v1584, 8.507059e+37
    %v1586 = vand.u32 %v1573, 2147483648
    %v1587 = vor.u32 1.1754944e-38, %v1586
    %v1588 = vsel %vm1585, %v1587, %v1583
    %v1589 = vmul.f32 1.0, %v1588
    %v1590 = vrcp.pop %v1574
    %v1591 = vmul.f32 %v1574, %v1590
    %v1592 = vsub.f32 1.0, %v1591
    %v1593 = vmul.f32 %v1590, %v1592
    %v1594 = vadd.f32 %v1590, %v1593
    %vm1595 = vweird.f32 %v1574
    %vm1596 = vweird.f32 %v1590
    %vm1597 = vmor %vm1595, %vm1596
    %v1598 = vsel %vm1597, %v1590, %v1594
    %v1599 = vand.u32 2147483647, %v1574
    %vm1600 = vcmp.eq.f32.partialorder %v1599, 8.507059e+37
    %v1601 = vand.u32 %v1574, 2147483648
    %v1602 = vor.u32 1.1754944e-38, %v1601
    %v1603 = vsel %vm1600, %v1602, %v1598
    %v1604 = vmul.f32 1.0, %v1603
    %v1605 = vadd.f32 %v1504, %v249
    %v1606 = vadd.f32 %v1507, %v254
    %1609 = vrot.lane.b32.xlu0 %v1605, 28
    %v1610 = vpop.permute.xlu0 %1609
    %1611 = vrot.lane.b32.xlu0 %v1606, 28
    %v1612 = vpop.permute.xlu0 %1611
    %v1615 = vmul.f32 %v1541, %v1610
    %v1616 = vmul.f32 %v1556, %v1612
    %v1617 = vadd.f32 %v233, %v1615
    %v1618 = vadd.f32 %v236, %v1616
    %v1619 = vtanh.pop %v1617
    %v1620 = vtanh.pop %v1618
    %v1621 = vsub.f32 1.0, %v1589
    %v1622 = vsub.f32 1.0, %v1604
    %v1623 = vmul.f32 %v1621, %v1619
    %v1624 = vmul.f32 %v1622, %v1620
    %1627 = vrot.lane.b32.xlu0 %v1472, 28
    %v1628 = vpop.permute.xlu0 %1627
    %1629 = vrot.lane.b32.xlu0 %v1473, 28
    %v1630 = vpop.permute.xlu0 %1629
    %v1633 = vmul.f32 %v1589, %v1628
    %v1634 = vmul.f32 %v1604, %v1630
    %v1635 = vadd.f32 %v1623, %v1633
    %v1636 = vadd.f32 %v1624, %v1634
    %vm1637 = vcmp.gt.s32.totalorder %v39, 7
    %v1638 = vsel %vm1637, 1, 0
    %v1639 = vperm.slane %v1638, 0
    %vm1640 = vcmp.eq.s32.totalorder %v1639, 1
    %1643 = vrot.lane.b32.xlu0 %v1635, 100
    %v1644 = vpop.permute.xlu0 %1643
    %1645 = vrot.lane.b32.xlu0 %v1636, 100
    %v1646 = vpop.permute.xlu0 %1645
    %v1649 = vsel %vm1640, %v1644, %v1472
    %v1650 = vsel %vm1640, %v1646, %v1473
    %v1651 = vstv %s40
    %vm1652 = vcmp.eq.s32.totalorder %v39, %v1651
    %v1653 = vsel %vm1652, 1, 0
    %v1654 = vperm.slane %v1653, 0
    %vm1655 = vcmp.eq.s32.totalorder %v1654, 1
    %v1656 = vsel %vm1655, %v1649, 0.0
    %v1657 = vsel %vm1655, %v1650, 0.0
    %v1658 = vld [vmem:[%s9] sm:$0x3]
    %v1659 = vld [vmem:[%s10] sm:$0x3]
    %1661 = vset.pattern.permute.xlu0 0
    %1662 = vperm.xlu0 %1661, %v1659
    %v1663 = vpop.permute.xlu0 %1662
    %v1666 = vsel %vm256, %v1658, 0
    %1668 = vmatpush.msra.mxu0 0.0
    %1669 = vmatpush.msra.mxu0 0.0
    %1670 = vmatpush.msra.mxu0 0.0
    %1671 = vmatpush.msra.mxu0 0.0
    %1672 = vmatpush.msra.mxu0 0.0
    %1673 = vmatpush.msra.mxu0 0.0
    %1674 = vmatpush.msra.mxu0 0.0
    %1675 = vmatpush.msra.mxu0 0.0
    %1676 = vmatpush.msra.mxu0 0.0
    %1677 = vmatpush.msra.mxu0 0.0
    %1678 = vmatpush.msra.mxu0 0.0
    %1679 = vmatpush.msra.mxu0 0.0
    %1680 = vmatpush.msra.mxu0 0.0
    %1681 = vmatpush.msra.mxu0 0.0
    %1682 = vmatpush.msra.mxu0 %v1657
    %1683 = vmatpush.msra.mxu0 %v1656
    %1684 = vmatmul.f32.gmra.mxu0 %v1666
    %v1685 = vpop.f32.mrf.mxu0
    %v1686 = vadd.f32 %v1663, %v1685
    %1687 = vdwg.mxu0
    %vm1688 = vcmask 25600
    %1689 = vst.msk [vmem:[#allocation4] sm:$0x3] %vm1688, %v1686
    // Predicated region
    $region42: #{tpu_custom_call.1} parent=1 // pred_check
      _
    $region43: #{tpu_custom_call.1} parent=1 // pred_check_branch
      %1691 = sbr.rel (0) target = $region45
    $region44: #{tpu_custom_call.1} parent=1 // pred_region
      %1693 = vsyncadd [#allocation5], 0
      %s1695 = sshll.u32 [#allocation4], 4
      %s1696 = int_to_ptr.vmem [resolvable:$true] %s1695
      %s1697 = sshll.u32 %s11, 4
      %s1698 = int_to_ptr.hbm [resolvable:$true] %s1697
      %1700 = dma.vmem_to_hbm [thread:$0]  %s1696, 32, %s1698, [#allocation5]
    $region45: #{tpu_custom_call.1} parent=1 // pred_fallthru
      _
    // Predicated region
    $region46: #{tpu_custom_call.1} parent=1 // pred_check
      _
    $region47: #{tpu_custom_call.1} parent=1 // pred_check_branch
      %1702 = sbr.rel (0) target = $region49
    $region48: #{tpu_custom_call.1} parent=1 // pred_region
      %1704 = dma.done [#allocation5], 32
    $region49: #{tpu_custom_call.1} parent=1 // pred_fallthru
      _
    %1705 = vsyncpa [#allocation5], 1

</llo_original>
